<compile_context>
chip_gen: v5e
topology: v5e:2x2
jax: 0.10.0
libtpu: 0.0.40
codegen_flags: <defaults>
</compile_context>

<pallas_src>
import math
from functools import partial

import numpy as np
import jax
import jax.numpy as jnp
from jax import lax
from jax.experimental import pallas as pl
from jax.experimental.pallas import tpu as pltpu

_INV_SQRT2 = 1.0 / math.sqrt(2.0)


def _gelu_exact(y):
    # exact (erf) GELU, matching torch.nn.GELU() default; computed in f32.
    return 0.5 * y * (1.0 + lax.erf(y * jnp.float32(_INV_SQRT2)))


# ----------------------------------------------------------------------------
# Fused Pallas kernel: B_TILE batch elements per grid step.
# ----------------------------------------------------------------------------
def _head4x_kernel(x_ref, tr1_ref, ua1_ref, b1_ref, tr2_ref, ua2_hbm, b2_ref,
                   o_ref, ua2_vmem, ua2_sem):
    # Kick off the stage-2 weight fetch immediately; it overlaps with all of
    # stage 1 (up1+conv1).  Issued and waited within the same grid step so it
    # is correct regardless of how steps are scheduled across cores; the
    # re-fetch on later steps is ~0.4 MB and itself overlaps with compute.
    ua2_copy = pltpu.make_async_copy(ua2_hbm, ua2_vmem, ua2_sem)
    ua2_copy.start()

    f32, bf16 = jnp.float32, jnp.bfloat16

    def conv_bn_gelu(x_bf16, tr_ref, ua_ref, bias_ref):
        # y = GELU( sum_dy TR[dy] @ (x @ UA[dy]) + bias )
        #   * x @ UA[dy]: big MXU matmul (bf16 in, f32 accumulate)
        #   * TR[dy] @ . : exact 0/1 row map (vertical tap + 2x row upsample,
        #     incl. zero padding), kept f32 -> no rounding of partial sums.
        m_out = tr_ref.shape[1]
        n_out = ua_ref.shape[-1]
        acc = jnp.zeros((m_out, n_out), f32)
        for dy in range(3):                                    # unrolled
            z = jnp.dot(x_bf16, ua_ref[dy], preferred_element_type=f32)
            acc = acc + jnp.dot(tr_ref[dy], z, preferred_element_type=f32)
        return _gelu_exact(acc + bias_ref[...])

    b, h0, wc0 = x_ref.shape
    x0 = x_ref[...].reshape(b * h0, wc0)                       # bf16 (B*H0, W0*Cin)

    y1 = conv_bn_gelu(x0, tr1_ref, ua1_ref, b1_ref)            # f32 (B*H1, W1*Cmid)
    y1 = y1.astype(bf16)                                       # stage-2 MXU input

    ua2_copy.wait()                                            # stage-2 weights ready
    y2 = conv_bn_gelu(y1, tr2_ref, ua2_vmem, b2_ref)           # f32 (B*H2, W2*Cout)
    o_ref[...] = y2.reshape(o_ref.shape).astype(o_ref.dtype)


@partial(jax.jit, static_argnums=(2, 3))
def head4x_forward(x_nchw, mats, cout, b_tile):
    tr1, ua1, b1, tr2, ua2, b2 = mats
    n, cin, h0, w0 = x_nchw.shape
    assert n % b_tile == 0
    h2 = tr2.shape[1] // b_tile
    wc_out = ua2.shape[-1]
    w2 = wc_out // cout

    # NCHW -> lane-dense (N, H, W*C) rows; bf16 for the MXU.
    x_rows = (jnp.transpose(x_nchw, (0, 2, 3, 1))
              .reshape(n, h0, w0 * cin).astype(jnp.bfloat16))

    out_rows = pl.pallas_call(
        _head4x_kernel,
        out_shape=jax.ShapeDtypeStruct((n, h2, wc_out), jnp.float32),
        grid_spec=pltpu.PrefetchScalarGridSpec(
            num_scalar_prefetch=0,
            grid=(n // b_tile,),
            in_specs=[
                pl.BlockSpec((b_tile, h0, w0 * cin), lambda b: (b, 0, 0)),
                # constant index maps -> these weights are DMA'd once and stay
                # resident in VMEM across grid steps.
                pl.BlockSpec(tr1.shape, lambda b: (0, 0, 0)),
                pl.BlockSpec(ua1.shape, lambda b: (0, 0, 0)),
                pl.BlockSpec(b1.shape, lambda b: (0, 0)),
                pl.BlockSpec(tr2.shape, lambda b: (0, 0, 0)),
                # UA2 (largest operand): left in HBM, manual single-buffered
                # DMA in-kernel so its fetch hides behind stage-1 compute.
                pl.BlockSpec(memory_space=pl.ANY),
                pl.BlockSpec(b2.shape, lambda b: (0, 0)),
            ],
            out_specs=pl.BlockSpec((b_tile, h2, wc_out), lambda b: (b, 0, 0)),
            scratch_shapes=[
                pltpu.VMEM(ua2.shape, ua2.dtype),   # stage-2 weight buffer
                pltpu.SemaphoreType.DMA(()),
            ],
        ),
        compiler_params=pltpu.CompilerParams(
            dimension_semantics=("parallel",),
            vmem_limit_bytes=32 * 1024 * 1024,
        ),
    )(x_rows, tr1, ua1, b1, tr2, ua2, b2)

    # lane-dense rows -> NCHW to match the PyTorch reference layout
    return out_rows.reshape(n, h2, w2, cout).transpose(0, 3, 1, 2)


# ----------------------------------------------------------------------------
# Host-side folding of (nearest-upsample, conv3x3 zero-pad, eval-BN) into
# matmul operands for the lane-dense (H, W*C) layout, reassociated so the big
# matmul runs on the pre-upsample rows.
# ----------------------------------------------------------------------------
def _row_upsample_mat(h_in):
    # R[h_out, h_in] = 1 iff h_in == h_out // 2    (nearest, scale=2)
    h_out = 2 * h_in
    m = np.zeros((h_out, h_in), np.float32)
    m[np.arange(h_out), np.arange(h_out) // 2] = 1.0
    return m


def _col_upsample_mat(w_in, c):
    # U[w0*c+ci, w1*c+cj] = 1 iff ci==cj and w0 == w1 // 2
    w_out = 2 * w_in
    sel = np.zeros((w_in, w_out), np.float32)
    sel[np.arange(w_out) // 2, np.arange(w_out)] = 1.0
    return np.kron(sel, np.eye(c, dtype=np.float32)).astype(np.float32)


def _vshift_mats(h):
    # T[dy][h, h'] = 1 iff h' == h + dy - 1 (in range), else 0 (zero padding)
    t = np.zeros((3, h, h), np.float32)
    rows = np.arange(h)
    for dy in range(3):
        src = rows + dy - 1
        ok = (src >= 0) & (src < h)
        t[dy, rows[ok], src[ok]] = 1.0
    return t


def _hmix_mats(w, k_scaled_oihw):
    # A[dy][w'*Cin+ci, w*Cout+co] = sum_dx [w' == w+dx-1, in range] K[co,ci,dy,dx]
    cout, cin = k_scaled_oihw.shape[:2]
    a = np.zeros((3, w * cin, w * cout), np.float32)
    cols = np.arange(w)
    for dy in range(3):
        for dx in range(3):
            src = cols + dx - 1
            ok = (src >= 0) & (src < w)
            s = np.zeros((w, w), np.float32)
            s[src[ok], cols[ok]] = 1.0
            a[dy] += np.kron(s, k_scaled_oihw[:, :, dy, dx].T)
    return a.astype(np.float32)


def build_stage_mats(p, h_in, w_in, b_tile):
    """Fold one (Upsample2x -> Conv3x3 -> eval-BN) stage into
         y = GELU( sum_dy TR[dy] @ x @ UA[dy] + bias )
       with TR[dy] = T[dy]@R (0/1 row map) and UA[dy] = U@A[dy]."""
    h_out, w_out = 2 * h_in, 2 * w_in
    cin = np.asarray(p["w"]).shape[1]

    scale = np.asarray(p["gamma"], np.float32) / np.sqrt(
        np.asarray(p["var"], np.float32) + np.float32(p["eps"]))
    bias = (np.asarray(p["beta"], np.float32)
            + scale * (np.asarray(p["b"], np.float32)
                       - np.asarray(p["mean"], np.float32)))
    k = np.asarray(p["w"], np.float32) * scale[:, None, None, None]  # BN folded

    t = _vshift_mats(h_out)                     # (3, Hout, Hout)
    r = _row_upsample_mat(h_in)                 # (Hout, Hin)
    u = _col_upsample_mat(w_in, cin)            # (Win*Cin, Wout*Cin)
    a = _hmix_mats(w_out, k)                    # (3, Wout*Cin, Wout*Cout)

    tr = np.einsum("dij,jk->dik", t, r)         # (3, Hout, Hin)   exact 0/1
    ua = np.einsum("ij,djk->dik", u, a)         # (3, Win*Cin, Wout*Cout)
    if b_tile > 1:                              # stacked batch rows: block-diag
        eye = np.eye(b_tile, dtype=np.float32)
        tr = np.stack([np.kron(eye, tr[d]) for d in range(3)])
    b_row = np.tile(bias, w_out)[None, :].astype(np.float32)   # (1, Wout*Cout)
    return tr, ua, b_row


def build_head_mats(p1, p2, h, w, b_tile):
    tr1, ua1, b1 = build_stage_mats(p1, h, w, b_tile)
    tr2, ua2, b2 = build_stage_mats(p2, 2 * h, 2 * w, b_tile)
    f32, bf16 = jnp.float32, jnp.bfloat16
    # bf16 for the big MXU operands; TR (0/1 selections) and biases stay f32.
    return (jnp.asarray(tr1, f32), jnp.asarray(ua1, bf16), jnp.asarray(b1, f32),
            jnp.asarray(tr2, f32), jnp.asarray(ua2, bf16), jnp.asarray(b2, f32))


def pick_b_tile(n, max_tile=8):
    # Stack batch rows for MXU M-utilization, but keep >= 2 grid steps so both
    # v7x TensorCores get work (v5e/v6e: the grid is a serial loop anyway).
    best = 1
    for t in range(1, min(max_tile, n) + 1):
        if n % t == 0 and (n // t) >= 2:
            best = t
    return best


# ----------------------------------------------------------------------------
# Parameter construction (deterministic, synthetic) and a plain-JAX reference.
# ----------------------------------------------------------------------------
def make_convblock_params(key, cin, cout, eps=1e-5):
    k_w, k_b, k_g, k_beta, k_m, k_v = jax.random.split(key, 6)
    fan_in = cin * 9
    bound = 1.0 / math.sqrt(fan_in)
    w_oihw = jax.random.uniform(k_w, (cout, cin, 3, 3), jnp.float32, -bound, bound)
    b_conv = jax.random.uniform(k_b, (cout,), jnp.float32, -bound, bound)
    gamma = 1.0 + 0.1 * jax.random.normal(k_g, (cout,), jnp.float32)
    beta = 0.1 * jax.random.normal(k_beta, (cout,), jnp.float32)
    run_mean = 0.1 * jax.random.normal(k_m, (cout,), jnp.float32)
    run_var = jnp.abs(1.0 + 0.1 * jax.random.normal(k_v, (cout,), jnp.float32))
    return dict(w=w_oihw, b=b_conv, gamma=gamma, beta=beta,
                mean=run_mean, var=run_var, eps=eps)


def head4x_reference(x_nchw, p1, p2):
    def convblock(x, p):
        y = lax.conv_general_dilated(
            x, p["w"], window_strides=(1, 1), padding=((1, 1), (1, 1)),
            dimension_numbers=("NCHW", "OIHW", "NCHW"))
        y = y + p["b"][None, :, None, None]
        inv_std = 1.0 / jnp.sqrt(p["var"] + p["eps"])
        y = (y - p["mean"][None, :, None, None]) \
            * (p["gamma"] * inv_std)[None, :, None, None] \
            + p["beta"][None, :, None, None]
        return 0.5 * y * (1.0 + lax.erf(y * _INV_SQRT2))

    x = jnp.repeat(jnp.repeat(x_nchw, 2, axis=2), 2, axis=3)
    x = convblock(x, p1)
    x = jnp.repeat(jnp.repeat(x, 2, axis=2), 2, axis=3)
    x = convblock(x, p2)
    return x


if __name__ == "__main__":
    # Head4x(in_channels=4, mid_channels=8, out_channels=4) on a (2,4,16,16) x.
    in_channels, mid_channels, out_channels = 4, 8, 4
    N, H, W = 2, 16, 16

    key = jax.random.PRNGKey(0)
    k_x, k_p1, k_p2 = jax.random.split(key, 3)

    x = jax.random.normal(k_x, (N, in_channels, H, W), jnp.float32)
    p1 = make_convblock_params(k_p1, in_channels, mid_channels)
    p2 = make_convblock_params(k_p2, mid_channels, out_channels)

    b_tile = pick_b_tile(N)                       # = 1 here -> grid=(2,)
    mats = build_head_mats(p1, p2, H, W, b_tile)

    out = head4x_forward(x, mats, out_channels, b_tile)
    out = jax.block_until_ready(out)

    assert out.shape == (N, out_channels, 4 * H, 4 * W), out.shape
    assert bool(jnp.all(jnp.isfinite(out)))

    # Correctness vs. a plain-JAX f32 reference of the original module
    # (tolerance covers bf16 matmul-operand rounding + MXU rounding).
    ref = jax.block_until_ready(head4x_reference(x, p1, p2))
    max_err = float(jnp.max(jnp.abs(out - ref)))
    assert max_err < 2.5e-2, f"max |pallas - reference| = {max_err}"

    print("KERNEL_OK")
</pallas_src>

<mosaic_0001>
module attributes {stable_mosaic.version = 11 : i64} {
  func.func @_head4x_kernel(%arg0: i32, %arg1: memref<1x16x64xbf16, #tpu.memory_space<vmem>>, %arg2: memref<3x32x16xf32, #tpu.memory_space<vmem>>, %arg3: memref<3x64x256xbf16, #tpu.memory_space<vmem>>, %arg4: memref<1x256xf32, #tpu.memory_space<vmem>>, %arg5: memref<3x64x32xf32, #tpu.memory_space<vmem>>, %arg6: memref<3x256x256xbf16, #tpu.memory_space<any>>, %arg7: memref<1x256xf32, #tpu.memory_space<vmem>>, %arg8: memref<1x64x256xf32, #tpu.memory_space<vmem>>, %arg9: memref<3x256x256xbf16, #tpu.memory_space<vmem>>, %arg10: memref<!tpu.dma_semaphore, #tpu.memory_space<semaphore_mem>>) attributes {dimension_semantics = [#tpu.dimension_semantics<parallel>], iteration_bounds = array<i64: 2>, scalar_prefetch = 0 : i64, scratch_operands = 2 : i64, tpu.core_type = #tpu.core_type<tc>, window_params = [{transform_indices = @transform_0, window_bounds = array<i64: 1, 16, 64>}, {pipeline_mode = #tpu.pipeline_mode<synchronous>, transform_indices = @transform_1, window_bounds = array<i64: 3, 32, 16>}, {pipeline_mode = #tpu.pipeline_mode<synchronous>, transform_indices = @transform_2, window_bounds = array<i64: 3, 64, 256>}, {pipeline_mode = #tpu.pipeline_mode<synchronous>, transform_indices = @transform_3, window_bounds = array<i64: 1, 256>}, {pipeline_mode = #tpu.pipeline_mode<synchronous>, transform_indices = @transform_4, window_bounds = array<i64: 3, 64, 32>}, {}, {pipeline_mode = #tpu.pipeline_mode<synchronous>, transform_indices = @transform_6, window_bounds = array<i64: 1, 256>}, {transform_indices = @transform_7, window_bounds = array<i64: 1, 64, 256>}]} {
    tpu.enqueue_dma source(%arg6 : memref<3x256x256xbf16, #tpu.memory_space<any>>) target(%arg9 : memref<3x256x256xbf16, #tpu.memory_space<vmem>>) target_semaphore(%arg10 : memref<!tpu.dma_semaphore, #tpu.memory_space<semaphore_mem>>)
    %c0 = arith.constant 0 : index
    %c0_0 = arith.constant 0 : index
    %c0_1 = arith.constant 0 : index
    %0 = vector.load %arg1[%c0, %c0_0, %c0_1] : memref<1x16x64xbf16, #tpu.memory_space<vmem>>, vector<1x16x64xbf16>
    %1 = vector.shape_cast %0 : vector<1x16x64xbf16> to vector<16x64xbf16>
    %cst = arith.constant 0.000000e+00 : f32
    %2 = vector.broadcast %cst : f32 to vector<32x256xf32>
    %c0_2 = arith.constant 0 : index
    %c0_3 = arith.constant 0 : index
    %c0_4 = arith.constant 0 : index
    %3 = vector.load %arg3[%c0_2, %c0_3, %c0_4] : memref<3x64x256xbf16, #tpu.memory_space<vmem>>, vector<1x64x256xbf16>
    %4 = vector.shape_cast %3 : vector<1x64x256xbf16> to vector<64x256xbf16>
    %cst_5 = arith.constant dense<0.000000e+00> : vector<16x256xf32>
    %5 = tpu.matmul %1, %4, %cst_5 {dimension_numbers = #tpu.dot_dimension_numbers<[1], [0], [0], [1], [0, 0, 1, 1], [], []>} : vector<16x64xbf16>, vector<64x256xbf16>, vector<16x256xf32> -> vector<16x256xf32>
    %c0_6 = arith.constant 0 : index
    %c0_7 = arith.constant 0 : index
    %c0_8 = arith.constant 0 : index
    %6 = vector.load %arg2[%c0_6, %c0_7, %c0_8] : memref<3x32x16xf32, #tpu.memory_space<vmem>>, vector<1x32x16xf32>
    %7 = vector.shape_cast %6 : vector<1x32x16xf32> to vector<32x16xf32>
    %cst_9 = arith.constant dense<0.000000e+00> : vector<32x256xf32>
    %8 = tpu.matmul %7, %5, %cst_9 {dimension_numbers = #tpu.dot_dimension_numbers<[1], [0], [0], [1], [0, 0, 1, 1], [], []>} : vector<32x16xf32>, vector<16x256xf32>, vector<32x256xf32> -> vector<32x256xf32>
    %9 = arith.addf %2, %8 : vector<32x256xf32>
    %c1 = arith.constant 1 : index
    %c0_10 = arith.constant 0 : index
    %c0_11 = arith.constant 0 : index
    %10 = vector.load %arg3[%c1, %c0_10, %c0_11] : memref<3x64x256xbf16, #tpu.memory_space<vmem>>, vector<1x64x256xbf16>
    %11 = vector.shape_cast %10 : vector<1x64x256xbf16> to vector<64x256xbf16>
    %cst_12 = arith.constant dense<0.000000e+00> : vector<16x256xf32>
    %12 = tpu.matmul %1, %11, %cst_12 {dimension_numbers = #tpu.dot_dimension_numbers<[1], [0], [0], [1], [0, 0, 1, 1], [], []>} : vector<16x64xbf16>, vector<64x256xbf16>, vector<16x256xf32> -> vector<16x256xf32>
    %c1_13 = arith.constant 1 : index
    %c0_14 = arith.constant 0 : index
    %c0_15 = arith.constant 0 : index
    %13 = vector.load %arg2[%c1_13, %c0_14, %c0_15] : memref<3x32x16xf32, #tpu.memory_space<vmem>>, vector<1x32x16xf32>
    %14 = vector.shape_cast %13 : vector<1x32x16xf32> to vector<32x16xf32>
    %cst_16 = arith.constant dense<0.000000e+00> : vector<32x256xf32>
    %15 = tpu.matmul %14, %12, %cst_16 {dimension_numbers = #tpu.dot_dimension_numbers<[1], [0], [0], [1], [0, 0, 1, 1], [], []>} : vector<32x16xf32>, vector<16x256xf32>, vector<32x256xf32> -> vector<32x256xf32>
    %16 = arith.addf %9, %15 : vector<32x256xf32>
    %c2 = arith.constant 2 : index
    %c0_17 = arith.constant 0 : index
    %c0_18 = arith.constant 0 : index
    %17 = vector.load %arg3[%c2, %c0_17, %c0_18] : memref<3x64x256xbf16, #tpu.memory_space<vmem>>, vector<1x64x256xbf16>
    %18 = vector.shape_cast %17 : vector<1x64x256xbf16> to vector<64x256xbf16>
    %cst_19 = arith.constant dense<0.000000e+00> : vector<16x256xf32>
    %19 = tpu.matmul %1, %18, %cst_19 {dimension_numbers = #tpu.dot_dimension_numbers<[1], [0], [0], [1], [0, 0, 1, 1], [], []>} : vector<16x64xbf16>, vector<64x256xbf16>, vector<16x256xf32> -> vector<16x256xf32>
    %c2_20 = arith.constant 2 : index
    %c0_21 = arith.constant 0 : index
    %c0_22 = arith.constant 0 : index
    %20 = vector.load %arg2[%c2_20, %c0_21, %c0_22] : memref<3x32x16xf32, #tpu.memory_space<vmem>>, vector<1x32x16xf32>
    %21 = vector.shape_cast %20 : vector<1x32x16xf32> to vector<32x16xf32>
    %cst_23 = arith.constant dense<0.000000e+00> : vector<32x256xf32>
    %22 = tpu.matmul %21, %19, %cst_23 {dimension_numbers = #tpu.dot_dimension_numbers<[1], [0], [0], [1], [0, 0, 1, 1], [], []>} : vector<32x16xf32>, vector<16x256xf32>, vector<32x256xf32> -> vector<32x256xf32>
    %23 = arith.addf %16, %22 : vector<32x256xf32>
    %c0_24 = arith.constant 0 : index
    %c0_25 = arith.constant 0 : index
    %24 = vector.load %arg4[%c0_24, %c0_25] : memref<1x256xf32, #tpu.memory_space<vmem>>, vector<1x256xf32>
    %25 = vector.broadcast %24 : vector<1x256xf32> to vector<32x256xf32>
    %26 = arith.addf %23, %25 : vector<32x256xf32>
    %cst_26 = arith.constant 5.000000e-01 : f32
    %27 = vector.broadcast %cst_26 : f32 to vector<32x256xf32>
    %28 = arith.mulf %27, %26 : vector<32x256xf32>
    %cst_27 = arith.constant 0.707106769 : f32
    %29 = vector.broadcast %cst_27 : f32 to vector<32x256xf32>
    %30 = arith.mulf %26, %29 : vector<32x256xf32>
    %31 = math.erf %30 : vector<32x256xf32>
    %cst_28 = arith.constant 1.000000e+00 : f32
    %32 = vector.broadcast %cst_28 : f32 to vector<32x256xf32>
    %33 = arith.addf %32, %31 : vector<32x256xf32>
    %34 = arith.mulf %28, %33 : vector<32x256xf32>
    %35 = arith.truncf %34 : vector<32x256xf32> to vector<32x256xbf16>
    tpu.wait_dma2 semaphore(%arg10 : memref<!tpu.dma_semaphore, #tpu.memory_space<semaphore_mem>>) src(%arg6 : memref<3x256x256xbf16, #tpu.memory_space<any>>) dst(%arg9 : memref<3x256x256xbf16, #tpu.memory_space<vmem>>)
    %cst_29 = arith.constant 0.000000e+00 : f32
    %36 = vector.broadcast %cst_29 : f32 to vector<64x256xf32>
    %c0_30 = arith.constant 0 : index
    %c0_31 = arith.constant 0 : index
    %c0_32 = arith.constant 0 : index
    %37 = vector.load %arg9[%c0_30, %c0_31, %c0_32] : memref<3x256x256xbf16, #tpu.memory_space<vmem>>, vector<1x256x256xbf16>
    %38 = vector.shape_cast %37 : vector<1x256x256xbf16> to vector<256x256xbf16>
    %cst_33 = arith.constant dense<0.000000e+00> : vector<32x256xf32>
    %39 = tpu.matmul %35, %38, %cst_33 {dimension_numbers = #tpu.dot_dimension_numbers<[1], [0], [0], [1], [0, 0, 1, 1], [], []>} : vector<32x256xbf16>, vector<256x256xbf16>, vector<32x256xf32> -> vector<32x256xf32>
    %c0_34 = arith.constant 0 : index
    %c0_35 = arith.constant 0 : index
    %c0_36 = arith.constant 0 : index
    %40 = vector.load %arg5[%c0_34, %c0_35, %c0_36] : memref<3x64x32xf32, #tpu.memory_space<vmem>>, vector<1x64x32xf32>
    %41 = vector.shape_cast %40 : vector<1x64x32xf32> to vector<64x32xf32>
    %cst_37 = arith.constant dense<0.000000e+00> : vector<64x256xf32>
    %42 = tpu.matmul %41, %39, %cst_37 {dimension_numbers = #tpu.dot_dimension_numbers<[1], [0], [0], [1], [0, 0, 1, 1], [], []>} : vector<64x32xf32>, vector<32x256xf32>, vector<64x256xf32> -> vector<64x256xf32>
    %43 = arith.addf %36, %42 : vector<64x256xf32>
    %c1_38 = arith.constant 1 : index
    %c0_39 = arith.constant 0 : index
    %c0_40 = arith.constant 0 : index
    %44 = vector.load %arg9[%c1_38, %c0_39, %c0_40] : memref<3x256x256xbf16, #tpu.memory_space<vmem>>, vector<1x256x256xbf16>
    %45 = vector.shape_cast %44 : vector<1x256x256xbf16> to vector<256x256xbf16>
    %cst_41 = arith.constant dense<0.000000e+00> : vector<32x256xf32>
    %46 = tpu.matmul %35, %45, %cst_41 {dimension_numbers = #tpu.dot_dimension_numbers<[1], [0], [0], [1], [0, 0, 1, 1], [], []>} : vector<32x256xbf16>, vector<256x256xbf16>, vector<32x256xf32> -> vector<32x256xf32>
    %c1_42 = arith.constant 1 : index
    %c0_43 = arith.constant 0 : index
    %c0_44 = arith.constant 0 : index
    %47 = vector.load %arg5[%c1_42, %c0_43, %c0_44] : memref<3x64x32xf32, #tpu.memory_space<vmem>>, vector<1x64x32xf32>
    %48 = vector.shape_cast %47 : vector<1x64x32xf32> to vector<64x32xf32>
    %cst_45 = arith.constant dense<0.000000e+00> : vector<64x256xf32>
    %49 = tpu.matmul %48, %46, %cst_45 {dimension_numbers = #tpu.dot_dimension_numbers<[1], [0], [0], [1], [0, 0, 1, 1], [], []>} : vector<64x32xf32>, vector<32x256xf32>, vector<64x256xf32> -> vector<64x256xf32>
    %50 = arith.addf %43, %49 : vector<64x256xf32>
    %c2_46 = arith.constant 2 : index
    %c0_47 = arith.constant 0 : index
    %c0_48 = arith.constant 0 : index
    %51 = vector.load %arg9[%c2_46, %c0_47, %c0_48] : memref<3x256x256xbf16, #tpu.memory_space<vmem>>, vector<1x256x256xbf16>
    %52 = vector.shape_cast %51 : vector<1x256x256xbf16> to vector<256x256xbf16>
    %cst_49 = arith.constant dense<0.000000e+00> : vector<32x256xf32>
    %53 = tpu.matmul %35, %52, %cst_49 {dimension_numbers = #tpu.dot_dimension_numbers<[1], [0], [0], [1], [0, 0, 1, 1], [], []>} : vector<32x256xbf16>, vector<256x256xbf16>, vector<32x256xf32> -> vector<32x256xf32>
    %c2_50 = arith.constant 2 : index
    %c0_51 = arith.constant 0 : index
    %c0_52 = arith.constant 0 : index
    %54 = vector.load %arg5[%c2_50, %c0_51, %c0_52] : memref<3x64x32xf32, #tpu.memory_space<vmem>>, vector<1x64x32xf32>
    %55 = vector.shape_cast %54 : vector<1x64x32xf32> to vector<64x32xf32>
    %cst_53 = arith.constant dense<0.000000e+00> : vector<64x256xf32>
    %56 = tpu.matmul %55, %53, %cst_53 {dimension_numbers = #tpu.dot_dimension_numbers<[1], [0], [0], [1], [0, 0, 1, 1], [], []>} : vector<64x32xf32>, vector<32x256xf32>, vector<64x256xf32> -> vector<64x256xf32>
    %57 = arith.addf %50, %56 : vector<64x256xf32>
    %c0_54 = arith.constant 0 : index
    %c0_55 = arith.constant 0 : index
    %58 = vector.load %arg7[%c0_54, %c0_55] : memref<1x256xf32, #tpu.memory_space<vmem>>, vector<1x256xf32>
    %59 = vector.broadcast %58 : vector<1x256xf32> to vector<64x256xf32>
    %60 = arith.addf %57, %59 : vector<64x256xf32>
    %cst_56 = arith.constant 5.000000e-01 : f32
    %61 = vector.broadcast %cst_56 : f32 to vector<64x256xf32>
    %62 = arith.mulf %61, %60 : vector<64x256xf32>
    %cst_57 = arith.constant 0.707106769 : f32
    %63 = vector.broadcast %cst_57 : f32 to vector<64x256xf32>
    %64 = arith.mulf %60, %63 : vector<64x256xf32>
    %65 = math.erf %64 : vector<64x256xf32>
    %cst_58 = arith.constant 1.000000e+00 : f32
    %66 = vector.broadcast %cst_58 : f32 to vector<64x256xf32>
    %67 = arith.addf %66, %65 : vector<64x256xf32>
    %68 = arith.mulf %62, %67 : vector<64x256xf32>
    %69 = vector.shape_cast %68 : vector<64x256xf32> to vector<1x64x256xf32>
    %c0_59 = arith.constant 0 : index
    %c0_60 = arith.constant 0 : index
    %c0_61 = arith.constant 0 : index
    %70 = vector.load %arg8[%c0_59, %c0_60, %c0_61] : memref<1x64x256xf32, #tpu.memory_space<vmem>>, vector<1x64x256xf32>
    tpu.vector_store %arg8[%c0_59, %c0_60, %c0_61], %69 {strides = array<i32>} : memref<1x64x256xf32, #tpu.memory_space<vmem>>, vector<1x64x256xf32>,
    return
  }
  func.func @transform_0(%arg0: i32) -> (i32, i32, i32) {
    %c0_i32 = arith.constant 0 : i32
    %c0_i32_0 = arith.constant 0 : i32
    %c0_i32_1 = arith.constant 0 : i32
    return %arg0, %c0_i32, %c0_i32_0 : i32, i32, i32
  }
  func.func @transform_1(%arg0: i32) -> (i32, i32, i32) {
    %c0_i32 = arith.constant 0 : i32
    %c0_i32_0 = arith.constant 0 : i32
    %c0_i32_1 = arith.constant 0 : i32
    %c0_i32_2 = arith.constant 0 : i32
    return %c0_i32, %c0_i32_0, %c0_i32_1 : i32, i32, i32
  }
  func.func @transform_2(%arg0: i32) -> (i32, i32, i32) {
    %c0_i32 = arith.constant 0 : i32
    %c0_i32_0 = arith.constant 0 : i32
    %c0_i32_1 = arith.constant 0 : i32
    %c0_i32_2 = arith.constant 0 : i32
    return %c0_i32, %c0_i32_0, %c0_i32_1 : i32, i32, i32
  }
  func.func @transform_3(%arg0: i32) -> (i32, i32) {
    %c0_i32 = arith.constant 0 : i32
    %c0_i32_0 = arith.constant 0 : i32
    %c0_i32_1 = arith.constant 0 : i32
    return %c0_i32, %c0_i32_0 : i32, i32
  }
  func.func @transform_4(%arg0: i32) -> (i32, i32, i32) {
    %c0_i32 = arith.constant 0 : i32
    %c0_i32_0 = arith.constant 0 : i32
    %c0_i32_1 = arith.constant 0 : i32
    %c0_i32_2 = arith.constant 0 : i32
    return %c0_i32, %c0_i32_0, %c0_i32_1 : i32, i32, i32
  }
  func.func @transform_6(%arg0: i32) -> (i32, i32) {
    %c0_i32 = arith.constant 0 : i32
    %c0_i32_0 = arith.constant 0 : i32
    %c0_i32_1 = arith.constant 0 : i32
    return %c0_i32, %c0_i32_0 : i32, i32
  }
  func.func @transform_7(%arg0: i32) -> (i32, i32, i32) {
    %c0_i32 = arith.constant 0 : i32
    %c0_i32_0 = arith.constant 0 : i32
    %c0_i32_1 = arith.constant 0 : i32
    return %arg0, %c0_i32, %c0_i32_0 : i32, i32, i32
  }
}

</mosaic_0001>

<llo_original>
// kernel: head4x_forward.1
$region0: #{head4x_forward.1}
  #allocation0 [shape = 'u32[]', space=smem, size = 0x4, offset = 0x4, fixed_abs, tag = 'smem constant byte address 0x4 - core index']
  #allocation1 [shape = 'u32[72,128]{1,0:T(1,128)}', space=vmem, size = 0x9000, scoped, tag = 'internal scratch']
  #allocation2 [shape = 'bf16[3,256,256]{2,1,0:T(8,128)(2,1)}', space=vmem, size = 0x60000, scoped, tag = 'scratch operand']
  #allocation3 [shape = 's32[1]{0}', space=sflag, size = 0x4, scoped, tag = 'scratch operand']
  #allocation4 [shape = 's32[]', space=sflag, size = 0x4, offset = 0, fixed_abs, tag = 'sflag constant byte address 0x0 - dummy sync flag']
  #allocation5 [shape = 's32[]', space=sflag, size = 0x4, offset = 0, fixed_abs, tag = 'sflag constant byte address 0x0 - dummy sync flag']
  #allocation6 [shape = 'u32[]', space=smem, size = 0x4, offset = 0x44, fixed_abs, tag = 'smem constant byte address 0x44 - assertion arg 0']
  #allocation7 [shape = 'u32[]', space=smem, size = 0x4, offset = 0x48, fixed_abs, tag = 'smem constant byte address 0x48 - assertion arg 1']
  %s0 = inlined_call_operand.vmem [shape: bf16[2,16,64], index: 0, kind: input, shape index: {}]
  %s1 = inlined_call_operand.vmem [shape: f32[3,32,16], index: 1, kind: input, shape index: {}]
  %s2 = inlined_call_operand.vmem [shape: bf16[3,64,256], index: 2, kind: input, shape index: {}]
  %s3 = inlined_call_operand.vmem [shape: f32[1,256], index: 3, kind: input, shape index: {}]
  %s4 = inlined_call_operand.vmem [shape: f32[3,64,32], index: 4, kind: input, shape index: {}]
  %s5 = inlined_call_operand.hbm [shape: bf16[3,256,256], index: 5, kind: input, shape index: {}]
  %s6 = inlined_call_operand.vmem [shape: f32[1,256], index: 6, kind: input, shape index: {}]
  %s7 = inlined_call_operand.vmem [shape: f32[2,64,256], index: 7, kind: output, shape index: {}]
  %s8 = sld [smem:[#allocation0]]
  $region61: #{head4x_forward.1} parent=0
    _
  %s10 = ssub.s32 1, %s8
  %s11 = scalar_select 0, %s10, %s8
  loop: start=0, step=1, limit=4
  $region2: #{head4x_forward.1} parent=0 // loop_pre_header
    _
  $region3: #{head4x_forward.1} parent=0 // loop_header
    %s13 = sphi 0, %s17
    %p14 = scmp.ge.s32.totalorder %s13, 4
    %s23 = sphi 0, %s25
    %s26 = sphi 0, %s23
    %s27 = sphi 0, %s26
    %s43 = sphi 0, %s27
    %s47 = sphi 0, %s47
    %s49 = sphi 0, %s47
    %s50 = sphi 0, %s49
    %s64 = sphi 0, %s50
    %s68 = sphi 0, %s68
    %s70 = sphi 0, %s68
    %s71 = sphi 0, %s70
    %s85 = sphi 0, %s71
    %s89 = sphi 0, %s89
    %s91 = sphi 0, %s89
    %s92 = sphi 0, %s91
    %s106 = sphi 0, %s92
    %s110 = sphi 0, %s110
    %s112 = sphi 0, %s110
    %s113 = sphi 0, %s112
    %s127 = sphi 0, %s113
    %s131 = sphi 0, %s131
    %s133 = sphi 0, %s131
    %s134 = sphi 0, %s133
    %s148 = sphi 0, %s134
    %s154 = sphi 0, %s156
    %s157 = sphi 0, %s154
    %s158 = sphi 0, %s157
    %s174 = sphi 0, %s158
  $region4: #{head4x_forward.1} parent=0 // loop_header_branch
    %16 = sbr.rel (%p14) target = $region8
  $region5: #{head4x_forward.1} parent=0 // loop_body
    %s18 = ssub.s32 %s13, 1
    %s19 = ssub.s32 %s13, 2
    %s20 = sadd.s32 %s13, 1
    %s21 = ssub.s32 %s13, %s20
    %p22 = scmp.eq.s32.totalorder %s21, 0
    %s24 = sadd.s32 %s23, 1
    %s25 = scalar_select %p22, %s23, %s24
    %p28 = pneg %p22
    %p29 = scmp.eq.s32.totalorder %s13, 1
    %p30 = por %p28, %p29
    %p31 = scmp.ne.s32.totalorder %s23, %s26
    %p32 = scmp.eq.s32.totalorder %s13, 0
    %p33 = por %p31, %p32
    %p34 = scmp.ne.s32.totalorder %s23, %s26
    %p35 = scmp.eq.s32.totalorder %s18, 1
    %p36 = por %p34, %p35
    %p37 = scmp.ne.s32.totalorder %s26, %s27
    %p38 = scmp.eq.s32.totalorder %s18, 0
    %p39 = por %p37, %p38
    %p40 = scmp.ne.s32.totalorder %s26, %s27
    %p41 = scmp.eq.s32.totalorder %s19, 1
    %p42 = por %p40, %p41
    %p44 = scmp.ne.s32.totalorder %s27, %s43
    %p45 = scmp.eq.s32.totalorder %s19, 0
    %p46 = por %p44, %p45
    %s48 = sadd.s32 %s47, 1
    %p51 = scmp.eq.s32.totalorder %s13, 1
    %p52 = scmp.ne.s32.totalorder %s47, %s49
    %p53 = scmp.eq.s32.totalorder %s13, 0
    %p54 = por %p52, %p53
    %p55 = scmp.ne.s32.totalorder %s47, %s49
    %p56 = scmp.eq.s32.totalorder %s18, 1
    %p57 = por %p55, %p56
    %p58 = scmp.ne.s32.totalorder %s49, %s50
    %p59 = scmp.eq.s32.totalorder %s18, 0
    %p60 = por %p58, %p59
    %p61 = scmp.ne.s32.totalorder %s49, %s50
    %p62 = scmp.eq.s32.totalorder %s19, 1
    %p63 = por %p61, %p62
    %p65 = scmp.ne.s32.totalorder %s50, %s64
    %p66 = scmp.eq.s32.totalorder %s19, 0
    %p67 = por %p65, %p66
    %s69 = sadd.s32 %s68, 1
    %p72 = scmp.eq.s32.totalorder %s13, 1
    %p73 = scmp.ne.s32.totalorder %s68, %s70
    %p74 = scmp.eq.s32.totalorder %s13, 0
    %p75 = por %p73, %p74
    %p76 = scmp.ne.s32.totalorder %s68, %s70
    %p77 = scmp.eq.s32.totalorder %s18, 1
    %p78 = por %p76, %p77
    %p79 = scmp.ne.s32.totalorder %s70, %s71
    %p80 = scmp.eq.s32.totalorder %s18, 0
    %p81 = por %p79, %p80
    %p82 = scmp.ne.s32.totalorder %s70, %s71
    %p83 = scmp.eq.s32.totalorder %s19, 1
    %p84 = por %p82, %p83
    %p86 = scmp.ne.s32.totalorder %s71, %s85
    %p87 = scmp.eq.s32.totalorder %s19, 0
    %p88 = por %p86, %p87
    %s90 = sadd.s32 %s89, 1
    %p93 = scmp.eq.s32.totalorder %s13, 1
    %p94 = scmp.ne.s32.totalorder %s89, %s91
    %p95 = scmp.eq.s32.totalorder %s13, 0
    %p96 = por %p94, %p95
    %p97 = scmp.ne.s32.totalorder %s89, %s91
    %p98 = scmp.eq.s32.totalorder %s18, 1
    %p99 = por %p97, %p98
    %p100 = scmp.ne.s32.totalorder %s91, %s92
    %p101 = scmp.eq.s32.totalorder %s18, 0
    %p102 = por %p100, %p101
    %p103 = scmp.ne.s32.totalorder %s91, %s92
    %p104 = scmp.eq.s32.totalorder %s19, 1
    %p105 = por %p103, %p104
    %p107 = scmp.ne.s32.totalorder %s92, %s106
    %p108 = scmp.eq.s32.totalorder %s19, 0
    %p109 = por %p107, %p108
    %s111 = sadd.s32 %s110, 1
    %p114 = scmp.eq.s32.totalorder %s13, 1
    %p115 = scmp.ne.s32.totalorder %s110, %s112
    %p116 = scmp.eq.s32.totalorder %s13, 0
    %p117 = por %p115, %p116
    %p118 = scmp.ne.s32.totalorder %s110, %s112
    %p119 = scmp.eq.s32.totalorder %s18, 1
    %p120 = por %p118, %p119
    %p121 = scmp.ne.s32.totalorder %s112, %s113
    %p122 = scmp.eq.s32.totalorder %s18, 0
    %p123 = por %p121, %p122
    %p124 = scmp.ne.s32.totalorder %s112, %s113
    %p125 = scmp.eq.s32.totalorder %s19, 1
    %p126 = por %p124, %p125
    %p128 = scmp.ne.s32.totalorder %s113, %s127
    %p129 = scmp.eq.s32.totalorder %s19, 0
    %p130 = por %p128, %p129
    %s132 = sadd.s32 %s131, 1
    %p135 = scmp.eq.s32.totalorder %s13, 1
    %p136 = scmp.ne.s32.totalorder %s131, %s133
    %p137 = scmp.eq.s32.totalorder %s13, 0
    %p138 = por %p136, %p137
    %p139 = scmp.ne.s32.totalorder %s131, %s133
    %p140 = scmp.eq.s32.totalorder %s18, 1
    %p141 = por %p139, %p140
    %p142 = scmp.ne.s32.totalorder %s133, %s134
    %p143 = scmp.eq.s32.totalorder %s18, 0
    %p144 = por %p142, %p143
    %p145 = scmp.ne.s32.totalorder %s133, %s134
    %p146 = scmp.eq.s32.totalorder %s19, 1
    %p147 = por %p145, %p146
    %p149 = scmp.ne.s32.totalorder %s134, %s148
    %p150 = scmp.eq.s32.totalorder %s19, 0
    %p151 = por %p149, %p150
    %s152 = ssub.s32 %s13, %s20
    %p153 = scmp.eq.s32.totalorder %s152, 0
    %s155 = sadd.s32 %s154, 1
    %s156 = scalar_select %p153, %s154, %s155
    %p159 = pneg %p153
    %p160 = scmp.eq.s32.totalorder %s13, 1
    %p161 = por %p159, %p160
    %p162 = scmp.ne.s32.totalorder %s154, %s157
    %p163 = scmp.eq.s32.totalorder %s13, 0
    %p164 = por %p162, %p163
    %p165 = scmp.ne.s32.totalorder %s154, %s157
    %p166 = scmp.eq.s32.totalorder %s18, 1
    %p167 = por %p165, %p166
    %p168 = scmp.ne.s32.totalorder %s157, %s158
    %p169 = scmp.eq.s32.totalorder %s18, 0
    %p170 = por %p168, %p169
    %p171 = scmp.ne.s32.totalorder %s157, %s158
    %p172 = scmp.eq.s32.totalorder %s19, 1
    %p173 = por %p171, %p172
    %p175 = scmp.ne.s32.totalorder %s158, %s174
    %p176 = scmp.eq.s32.totalorder %s19, 0
    %p177 = por %p175, %p176
    %p178 = scmp.le.s32.totalorder 1, %s13
    %p179 = scmp.lt.s32.totalorder %s13, 3
    %p180 = pnand %p178, %p179
    %p181 = pneg %p180
    // Predicated region
    $region9: #{head4x_forward.1} parent=5 // pred_check
      _
    $region10: #{head4x_forward.1} parent=5 // pred_check_branch
      %183 = sbr.rel (%p180) target = $region12
    $region11: #{head4x_forward.1} parent=5 // pred_region
      %s184 = ssub.s32 %s13, 1
      // Predicated region
      $region13: #{head4x_forward.1} parent=11 // pred_check
        %p185 = pneg %p60
      $region14: #{head4x_forward.1} parent=11 // pred_check_branch
        %187 = sbr.rel (%p185) target = $region16
      $region15: #{head4x_forward.1} parent=11 // pred_region
        _
      $region16: #{head4x_forward.1} parent=11 // pred_fallthru
        _
      // Predicated region
      $region17: #{head4x_forward.1} parent=11 // pred_check
        %p188 = pneg %p81
      $region18: #{head4x_forward.1} parent=11 // pred_check_branch
        %190 = sbr.rel (%p188) target = $region20
      $region19: #{head4x_forward.1} parent=11 // pred_region
        _
      $region20: #{head4x_forward.1} parent=11 // pred_fallthru
        _
      // Predicated region
      $region21: #{head4x_forward.1} parent=11 // pred_check
        %p191 = pneg %p102
      $region22: #{head4x_forward.1} parent=11 // pred_check_branch
        %193 = sbr.rel (%p191) target = $region24
      $region23: #{head4x_forward.1} parent=11 // pred_region
        _
      $region24: #{head4x_forward.1} parent=11 // pred_fallthru
        _
      // Predicated region
      $region25: #{head4x_forward.1} parent=11 // pred_check
        %p194 = pneg %p123
      $region26: #{head4x_forward.1} parent=11 // pred_check_branch
        %196 = sbr.rel (%p194) target = $region28
      $region27: #{head4x_forward.1} parent=11 // pred_region
        _
      $region28: #{head4x_forward.1} parent=11 // pred_fallthru
        _
      // Predicated region
      $region29: #{head4x_forward.1} parent=11 // pred_check
        %p197 = pneg %p144
      $region30: #{head4x_forward.1} parent=11 // pred_check_branch
        %199 = sbr.rel (%p197) target = $region32
      $region31: #{head4x_forward.1} parent=11 // pred_region
        _
      $region32: #{head4x_forward.1} parent=11 // pred_fallthru
        _
    $region12: #{head4x_forward.1} parent=5 // pred_fallthru
      _
    %p200 = scmp.lt.s32.totalorder %s13, 2
    // Predicated region
    $region33: #{head4x_forward.1} parent=5 // pred_check
      %p201 = pneg %p200
    $region34: #{head4x_forward.1} parent=5 // pred_check_branch
      %203 = sbr.rel (%p201) target = $region36
    $region35: #{head4x_forward.1} parent=5 // pred_region
      // Predicated region
      $region37: #{head4x_forward.1} parent=35 // pred_check
        %p204 = pneg %p33
      $region38: #{head4x_forward.1} parent=35 // pred_check_branch
        %206 = sbr.rel (%p204) target = $region40
      $region39: #{head4x_forward.1} parent=35 // pred_region
        %p207 = scmp.lt.s32.totalorder %s13, 1
        %s208 = scalar_select %p207, %s13, 1
        %s209 = smul.addr %s208, 2
        %s210 = smul.addr %s209, 4
        %s211 = scalar_lea.vmem %s0, %s210
      $region40: #{head4x_forward.1} parent=35 // pred_fallthru
        _
    $region36: #{head4x_forward.1} parent=5 // pred_fallthru
      _
    %p212 = scmp.le.s32.totalorder 1, %s13
    %p213 = scmp.lt.s32.totalorder %s13, 3
    %p214 = pnand %p212, %p213
    %p215 = pneg %p214
    // Predicated region
    $region41: #{head4x_forward.1} parent=5 // pred_check
      _
    $region42: #{head4x_forward.1} parent=5 // pred_check_branch
      %217 = sbr.rel (%p214) target = $region44
    $region43: #{head4x_forward.1} parent=5 // pred_region
      %s218 = ssub.s32 %s13, 1
      %p219 = scmp.lt.s32.totalorder %s18, 1
      %s220 = scalar_select %p219, %s18, 1
      %s221 = smul.addr %s220, 2
      %s222 = smul.addr %s221, 4
      %s223 = scalar_lea.vmem %s0, %s222
      %p224 = pneg %p39
      %p225 = pneg %p36
      %p226 = pneg %p60
      %p227 = pneg %p57
      %p228 = pneg %p81
      %p229 = pneg %p78
      %p230 = pneg %p102
      %p231 = pneg %p99
      %p232 = pneg %p123
      %p233 = pneg %p120
      %p234 = pneg %p144
      %p235 = pneg %p141
      %p236 = pneg %p170
      %p237 = pneg %p167
      %p238 = scmp.lt.s32.totalorder %s18, 1
      %s239 = scalar_select %p238, %s18, 1
      %s240 = smul.addr %s239, 16
      %s241 = smul.addr %s240, 8
      %s242 = scalar_lea.vmem %s7, %s241
      %p243 = scmp.lt.s32.totalorder %s18, 1
      %s244 = scalar_select %p243, %s18, 1
      %s245 = smul.addr %s244, 2
      %s246 = smul.addr %s245, 4
      %s247 = scalar_lea.vmem %s0, %s246
      %p248 = scmp.lt.s32.totalorder %s18, 1
      %s249 = scalar_select %p248, %s18, 1
      %s250 = smul.addr %s249, 16
      %s251 = smul.addr %s250, 8
      %s252 = scalar_lea.vmem %s7, %s251
      // Predicated region
      $region45: #{head4x_forward.1} parent=43 // pred_check
        _
      $region46: #{head4x_forward.1} parent=43 // pred_check_branch
        %255 = sbr.rel target = $region48
      $region47: #{head4x_forward.1} parent=43 // pred_region
        %256 = sst [smem:[#allocation6]] [#allocation5]
        %257 = sst [smem:[#allocation7]] [#allocation4]
      $region48: #{head4x_forward.1} parent=43 // pred_fallthru
        _
      %259 = shalt.err (0)
      %s261 = sshll.u32 %s5, 4
      %s262 = int_to_ptr.hbm [resolvable:$true] %s261
      %s263 = sshll.u32 [#allocation2], 4
      %s264 = int_to_ptr.vmem [resolvable:$true] %s263
      %266 = dma.hbm_to_vmem [thread:$0]  %s262, 12288, %s264, [#allocation3]
      %v267 = vld [vmem:[%s247] sm:$0xf]
      %v268 = vld [vmem:[%s247 + $0x4] sm:$0xf]
      %v269 = vld [vmem:[%s2] sm:$0xff]
      %v270 = vld [vmem:[%s2 + $0x8] sm:$0xff]
      %v271 = vld [vmem:[%s2 + $0x10] sm:$0xff]
      %v272 = vld [vmem:[%s2 + $0x18] sm:$0xff]
      %v273 = vld [vmem:[%s2 + $0x20] sm:$0xff]
      %v274 = vld [vmem:[%s2 + $0x28] sm:$0xff]
      %v275 = vld [vmem:[%s2 + $0x30] sm:$0xff]
      %v276 = vld [vmem:[%s2 + $0x38] sm:$0xff]
      %v279 = vunpack.c.l.b16 %v267
      %v280 = vunpack.c.l.b16 %v268
      %v281 = vpack.c.b16 %v280, %v279
      %v290 = vunpack.c.l.b16 %v269
      %v291 = vunpack.c.h.b16 %v269
      %v292 = vunpack.c.l.b16 %v270
      %v293 = vunpack.c.h.b16 %v270
      %v294 = vunpack.c.l.b16 %v271
      %v295 = vunpack.c.h.b16 %v271
      %v296 = vunpack.c.l.b16 %v272
      %v297 = vunpack.c.h.b16 %v272
      %v298 = vunpack.c.l.b16 %v273
      %v299 = vunpack.c.h.b16 %v273
      %v300 = vunpack.c.l.b16 %v274
      %v301 = vunpack.c.h.b16 %v274
      %v302 = vunpack.c.l.b16 %v275
      %v303 = vunpack.c.h.b16 %v275
      %v304 = vunpack.c.l.b16 %v276
      %v305 = vunpack.c.h.b16 %v276
      %v306 = vpack.c.b16 %v292, %v290
      %v307 = vpack.c.b16 %v293, %v291
      %v308 = vpack.c.b16 %v296, %v294
      %v309 = vpack.c.b16 %v297, %v295
      %v310 = vpack.c.b16 %v300, %v298
      %v311 = vpack.c.b16 %v301, %v299
      %v312 = vpack.c.b16 %v304, %v302
      %v313 = vpack.c.b16 %v305, %v303
      %vm322 = vcmask 523264
      %v324 = vsel %vm322, %v281, 0
      %326 = vmatpush.bf16.msra.mxu0 0
      %327 = vmatpush.bf16.msra.mxu0 0
      %328 = vmatpush.bf16.msra.mxu0 0
      %329 = vmatpush.bf16.msra.mxu0 0
      %330 = vmatpush.bf16.msra.mxu0 %v312
      %331 = vmatpush.bf16.msra.mxu0 %v310
      %332 = vmatpush.bf16.msra.mxu0 %v308
      %333 = vmatpush.bf16.msra.mxu0 %v306
      %334 = vmatmul.bf16.gmra.mxu0 %v324
      %v335 = vpop.f32.mrf.mxu0
      %v336 = vadd.f32 0.0, %v335
      %v337 = vpop.f32.mrf.mxu0
      %v338 = vadd.f32 0.0, %v337
      %339 = vdwg.mxu0
      %340 = vmatpush.bf16.msra.mxu0 0
      %341 = vmatpush.bf16.msra.mxu0 0
      %342 = vmatpush.bf16.msra.mxu0 0
      %343 = vmatpush.bf16.msra.mxu0 0
      %344 = vmatpush.bf16.msra.mxu0 %v313
      %345 = vmatpush.bf16.msra.mxu0 %v311
      %346 = vmatpush.bf16.msra.mxu0 %v309
      %347 = vmatpush.bf16.msra.mxu0 %v307
      %348 = vmatmul.bf16.gmra.mxu0 %v324
      %v349 = vpop.f32.mrf.mxu0
      %v350 = vadd.f32 0.0, %v349
      %v351 = vpop.f32.mrf.mxu0
      %v352 = vadd.f32 0.0, %v351
      %353 = vdwg.mxu0
      %v354 = vld [vmem:[%s1] sm:$0xff]
      %v355 = vld [vmem:[%s1 + $0x8] sm:$0xff]
      %v356 = vld [vmem:[%s1 + $0x10] sm:$0xff]
      %v357 = vld [vmem:[%s1 + $0x18] sm:$0xff]
      %s358 = scalar_lea.vmem %s2, 64
      %v359 = vld [vmem:[%s358] sm:$0xff]
      %v360 = vld [vmem:[%s358 + $0x8] sm:$0xff]
      %v361 = vld [vmem:[%s358 + $0x10] sm:$0xff]
      %v362 = vld [vmem:[%s358 + $0x18] sm:$0xff]
      %v363 = vld [vmem:[%s358 + $0x20] sm:$0xff]
      %v364 = vld [vmem:[%s358 + $0x28] sm:$0xff]
      %v365 = vld [vmem:[%s358 + $0x30] sm:$0xff]
      %v366 = vld [vmem:[%s358 + $0x38] sm:$0xff]
      %v375 = vunpack.c.l.b16 %v359
      %v376 = vunpack.c.h.b16 %v359
      %v377 = vunpack.c.l.b16 %v360
      %v378 = vunpack.c.h.b16 %v360
      %v379 = vunpack.c.l.b16 %v361
      %v380 = vunpack.c.h.b16 %v361
      %v381 = vunpack.c.l.b16 %v362
      %v382 = vunpack.c.h.b16 %v362
      %v383 = vunpack.c.l.b16 %v363
      %v384 = vunpack.c.h.b16 %v363
      %v385 = vunpack.c.l.b16 %v364
      %v386 = vunpack.c.h.b16 %v364
      %v387 = vunpack.c.l.b16 %v365
      %v388 = vunpack.c.h.b16 %v365
      %v389 = vunpack.c.l.b16 %v366
      %v390 = vunpack.c.h.b16 %v366
      %v391 = vpack.c.b16 %v377, %v375
      %v392 = vpack.c.b16 %v378, %v376
      %v393 = vpack.c.b16 %v381, %v379
      %v394 = vpack.c.b16 %v382, %v380
      %v395 = vpack.c.b16 %v385, %v383
      %v396 = vpack.c.b16 %v386, %v384
      %v397 = vpack.c.b16 %v389, %v387
      %v398 = vpack.c.b16 %v390, %v388
      %407 = vmatpush.bf16.msra.mxu0 0
      %408 = vmatpush.bf16.msra.mxu0 0
      %409 = vmatpush.bf16.msra.mxu0 0
      %410 = vmatpush.bf16.msra.mxu0 0
      %411 = vmatpush.bf16.msra.mxu0 %v397
      %412 = vmatpush.bf16.msra.mxu0 %v395
      %413 = vmatpush.bf16.msra.mxu0 %v393
      %414 = vmatpush.bf16.msra.mxu0 %v391
      %415 = vmatmul.bf16.gmra.mxu0 %v324
      %v416 = vpop.f32.mrf.mxu0
      %v417 = vadd.f32 0.0, %v416
      %v418 = vpop.f32.mrf.mxu0
      %v419 = vadd.f32 0.0, %v418
      %420 = vdwg.mxu0
      %421 = vmatpush.bf16.msra.mxu0 0
      %422 = vmatpush.bf16.msra.mxu0 0
      %423 = vmatpush.bf16.msra.mxu0 0
      %424 = vmatpush.bf16.msra.mxu0 0
      %425 = vmatpush.bf16.msra.mxu0 %v398
      %426 = vmatpush.bf16.msra.mxu0 %v396
      %427 = vmatpush.bf16.msra.mxu0 %v394
      %428 = vmatpush.bf16.msra.mxu0 %v392
      %429 = vmatmul.bf16.gmra.mxu0 %v324
      %v430 = vpop.f32.mrf.mxu0
      %v431 = vadd.f32 0.0, %v430
      %v432 = vpop.f32.mrf.mxu0
      %v433 = vadd.f32 0.0, %v432
      %434 = vdwg.mxu0
      %s435 = scalar_lea.vmem %s1, 32
      %v436 = vld [vmem:[%s435] sm:$0xff]
      %v437 = vld [vmem:[%s435 + $0x8] sm:$0xff]
      %v438 = vld [vmem:[%s435 + $0x10] sm:$0xff]
      %v439 = vld [vmem:[%s435 + $0x18] sm:$0xff]
      %vm440 = vcmask 130048
      %v442 = vsel %vm440, %v436, 0
      %v445 = vsel %vm440, %v437, 0
      %v448 = vsel %vm440, %v438, 0
      %v451 = vsel %vm440, %v439, 0
      %453 = vmatpush.msra.mxu0 0.0
      %454 = vmatpush.msra.mxu0 0.0
      %455 = vmatpush.msra.mxu0 0.0
      %456 = vmatpush.msra.mxu0 0.0
      %457 = vmatpush.msra.mxu0 0.0
      %458 = vmatpush.msra.mxu0 0.0
      %459 = vmatpush.msra.mxu0 0.0
      %460 = vmatpush.msra.mxu0 0.0
      %461 = vmatpush.msra.mxu0 0.0
      %462 = vmatpush.msra.mxu0 0.0
      %463 = vmatpush.msra.mxu0 0.0
      %464 = vmatpush.msra.mxu0 0.0
      %465 = vmatpush.msra.mxu0 0.0
      %466 = vmatpush.msra.mxu0 0.0
      %467 = vmatpush.msra.mxu0 %v419
      %468 = vmatpush.msra.mxu0 %v417
      %469 = vmatmul.f32.gmra.mxu0 %v442
      %v470 = vpop.f32.mrf.mxu0
      %v471 = vadd.f32 0.0, %v470
      %472 = vmatmul.f32.gmra.mxu0 %v445
      %v473 = vpop.f32.mrf.mxu0
      %v474 = vadd.f32 0.0, %v473
      %475 = vmatmul.f32.gmra.mxu0 %v448
      %v476 = vpop.f32.mrf.mxu0
      %v477 = vadd.f32 0.0, %v476
      %478 = vmatmul.f32.gmra.mxu0 %v451
      %v479 = vpop.f32.mrf.mxu0
      %v480 = vadd.f32 0.0, %v479
      %481 = vdwg.mxu0
      %482 = vmatpush.msra.mxu0 0.0
      %483 = vmatpush.msra.mxu0 0.0
      %484 = vmatpush.msra.mxu0 0.0
      %485 = vmatpush.msra.mxu0 0.0
      %486 = vmatpush.msra.mxu0 0.0
      %487 = vmatpush.msra.mxu0 0.0
      %488 = vmatpush.msra.mxu0 0.0
      %489 = vmatpush.msra.mxu0 0.0
      %490 = vmatpush.msra.mxu0 0.0
      %491 = vmatpush.msra.mxu0 0.0
      %492 = vmatpush.msra.mxu0 0.0
      %493 = vmatpush.msra.mxu0 0.0
      %494 = vmatpush.msra.mxu0 0.0
      %495 = vmatpush.msra.mxu0 0.0
      %496 = vmatpush.msra.mxu0 %v433
      %497 = vmatpush.msra.mxu0 %v431
      %498 = vmatmul.f32.gmra.mxu0 %v442
      %v499 = vpop.f32.mrf.mxu0
      %v500 = vadd.f32 0.0, %v499
      %501 = vmatmul.f32.gmra.mxu0 %v445
      %v502 = vpop.f32.mrf.mxu0
      %v503 = vadd.f32 0.0, %v502
      %504 = vmatmul.f32.gmra.mxu0 %v448
      %v505 = vpop.f32.mrf.mxu0
      %v506 = vadd.f32 0.0, %v505
      %507 = vmatmul.f32.gmra.mxu0 %v451
      %v508 = vpop.f32.mrf.mxu0
      %v509 = vadd.f32 0.0, %v508
      %510 = vdwg.mxu0
      %v512 = vsel %vm440, %v354, 0
      %v515 = vsel %vm440, %v355, 0
      %v518 = vsel %vm440, %v356, 0
      %v521 = vsel %vm440, %v357, 0
      %523 = vmatpush.msra.mxu0 0.0
      %524 = vmatpush.msra.mxu0 0.0
      %525 = vmatpush.msra.mxu0 0.0
      %526 = vmatpush.msra.mxu0 0.0
      %527 = vmatpush.msra.mxu0 0.0
      %528 = vmatpush.msra.mxu0 0.0
      %529 = vmatpush.msra.mxu0 0.0
      %530 = vmatpush.msra.mxu0 0.0
      %531 = vmatpush.msra.mxu0 0.0
      %532 = vmatpush.msra.mxu0 0.0
      %533 = vmatpush.msra.mxu0 0.0
      %534 = vmatpush.msra.mxu0 0.0
      %535 = vmatpush.msra.mxu0 0.0
      %536 = vmatpush.msra.mxu0 0.0
      %537 = vmatpush.msra.mxu0 %v338
      %538 = vmatpush.msra.mxu0 %v336
      %539 = vmatmul.f32.gmra.mxu0 %v512
      %v540 = vpop.f32.mrf.mxu0
      %v541 = vadd.f32 %v471, %v540
      %542 = vmatmul.f32.gmra.mxu0 %v515
      %v543 = vpop.f32.mrf.mxu0
      %v544 = vadd.f32 %v474, %v543
      %545 = vmatmul.f32.gmra.mxu0 %v518
      %v546 = vpop.f32.mrf.mxu0
      %v547 = vadd.f32 %v477, %v546
      %548 = vmatmul.f32.gmra.mxu0 %v521
      %v549 = vpop.f32.mrf.mxu0
      %v550 = vadd.f32 %v480, %v549
      %551 = vdwg.mxu0
      %552 = vmatpush.msra.mxu0 0.0
      %553 = vmatpush.msra.mxu0 0.0
      %554 = vmatpush.msra.mxu0 0.0
      %555 = vmatpush.msra.mxu0 0.0
      %556 = vmatpush.msra.mxu0 0.0
      %557 = vmatpush.msra.mxu0 0.0
      %558 = vmatpush.msra.mxu0 0.0
      %559 = vmatpush.msra.mxu0 0.0
      %560 = vmatpush.msra.mxu0 0.0
      %561 = vmatpush.msra.mxu0 0.0
      %562 = vmatpush.msra.mxu0 0.0
      %563 = vmatpush.msra.mxu0 0.0
      %564 = vmatpush.msra.mxu0 0.0
      %565 = vmatpush.msra.mxu0 0.0
      %566 = vmatpush.msra.mxu0 %v352
      %567 = vmatpush.msra.mxu0 %v350
      %568 = vmatmul.f32.gmra.mxu0 %v512
      %v569 = vpop.f32.mrf.mxu0
      %v570 = vadd.f32 %v500, %v569
      %571 = vmatmul.f32.gmra.mxu0 %v515
      %v572 = vpop.f32.mrf.mxu0
      %v573 = vadd.f32 %v503, %v572
      %574 = vmatmul.f32.gmra.mxu0 %v518
      %v575 = vpop.f32.mrf.mxu0
      %v576 = vadd.f32 %v506, %v575
      %577 = vmatmul.f32.gmra.mxu0 %v521
      %v578 = vpop.f32.mrf.mxu0
      %v579 = vadd.f32 %v509, %v578
      %580 = vdwg.mxu0
      %s581 = scalar_lea.vmem %s2, 128
      %v582 = vld [vmem:[%s581] sm:$0xff]
      %v583 = vld [vmem:[%s581 + $0x8] sm:$0xff]
      %v584 = vld [vmem:[%s581 + $0x10] sm:$0xff]
      %v585 = vld [vmem:[%s581 + $0x18] sm:$0xff]
      %v586 = vld [vmem:[%s581 + $0x20] sm:$0xff]
      %v587 = vld [vmem:[%s581 + $0x28] sm:$0xff]
      %v588 = vld [vmem:[%s581 + $0x30] sm:$0xff]
      %v589 = vld [vmem:[%s581 + $0x38] sm:$0xff]
      %v598 = vunpack.c.l.b16 %v582
      %v599 = vunpack.c.h.b16 %v582
      %v600 = vunpack.c.l.b16 %v583
      %v601 = vunpack.c.h.b16 %v583
      %v602 = vunpack.c.l.b16 %v584
      %v603 = vunpack.c.h.b16 %v584
      %v604 = vunpack.c.l.b16 %v585
      %v605 = vunpack.c.h.b16 %v585
      %v606 = vunpack.c.l.b16 %v586
      %v607 = vunpack.c.h.b16 %v586
      %v608 = vunpack.c.l.b16 %v587
      %v609 = vunpack.c.h.b16 %v587
      %v610 = vunpack.c.l.b16 %v588
      %v611 = vunpack.c.h.b16 %v588
      %v612 = vunpack.c.l.b16 %v589
      %v613 = vunpack.c.h.b16 %v589
      %v614 = vpack.c.b16 %v600, %v598
      %v615 = vpack.c.b16 %v601, %v599
      %v616 = vpack.c.b16 %v604, %v602
      %v617 = vpack.c.b16 %v605, %v603
      %v618 = vpack.c.b16 %v608, %v606
      %v619 = vpack.c.b16 %v609, %v607
      %v620 = vpack.c.b16 %v612, %v610
      %v621 = vpack.c.b16 %v613, %v611
      %630 = vmatpush.bf16.msra.mxu0 0
      %631 = vmatpush.bf16.msra.mxu0 0
      %632 = vmatpush.bf16.msra.mxu0 0
      %633 = vmatpush.bf16.msra.mxu0 0
      %634 = vmatpush.bf16.msra.mxu0 %v620
      %635 = vmatpush.bf16.msra.mxu0 %v618
      %636 = vmatpush.bf16.msra.mxu0 %v616
      %637 = vmatpush.bf16.msra.mxu0 %v614
      %638 = vmatmul.bf16.gmra.mxu0 %v324
      %v639 = vpop.f32.mrf.mxu0
      %v640 = vadd.f32 0.0, %v639
      %v641 = vpop.f32.mrf.mxu0
      %v642 = vadd.f32 0.0, %v641
      %643 = vdwg.mxu0
      %644 = vmatpush.bf16.msra.mxu0 0
      %645 = vmatpush.bf16.msra.mxu0 0
      %646 = vmatpush.bf16.msra.mxu0 0
      %647 = vmatpush.bf16.msra.mxu0 0
      %648 = vmatpush.bf16.msra.mxu0 %v621
      %649 = vmatpush.bf16.msra.mxu0 %v619
      %650 = vmatpush.bf16.msra.mxu0 %v617
      %651 = vmatpush.bf16.msra.mxu0 %v615
      %652 = vmatmul.bf16.gmra.mxu0 %v324
      %v653 = vpop.f32.mrf.mxu0
      %v654 = vadd.f32 0.0, %v653
      %v655 = vpop.f32.mrf.mxu0
      %v656 = vadd.f32 0.0, %v655
      %657 = vdwg.mxu0
      %s658 = scalar_lea.vmem %s1, 64
      %v659 = vld [vmem:[%s658] sm:$0xff]
      %v660 = vld [vmem:[%s658 + $0x8] sm:$0xff]
      %v661 = vld [vmem:[%s658 + $0x10] sm:$0xff]
      %v662 = vld [vmem:[%s658 + $0x18] sm:$0xff]
      %v664 = vsel %vm440, %v659, 0
      %v667 = vsel %vm440, %v660, 0
      %v670 = vsel %vm440, %v661, 0
      %v673 = vsel %vm440, %v662, 0
      %675 = vmatpush.msra.mxu0 0.0
      %676 = vmatpush.msra.mxu0 0.0
      %677 = vmatpush.msra.mxu0 0.0
      %678 = vmatpush.msra.mxu0 0.0
      %679 = vmatpush.msra.mxu0 0.0
      %680 = vmatpush.msra.mxu0 0.0
      %681 = vmatpush.msra.mxu0 0.0
      %682 = vmatpush.msra.mxu0 0.0
      %683 = vmatpush.msra.mxu0 0.0
      %684 = vmatpush.msra.mxu0 0.0
      %685 = vmatpush.msra.mxu0 0.0
      %686 = vmatpush.msra.mxu0 0.0
      %687 = vmatpush.msra.mxu0 0.0
      %688 = vmatpush.msra.mxu0 0.0
      %689 = vmatpush.msra.mxu0 %v642
      %690 = vmatpush.msra.mxu0 %v640
      %691 = vmatmul.f32.gmra.mxu0 %v664
      %v692 = vpop.f32.mrf.mxu0
      %v693 = vadd.f32 0.0, %v692
      %694 = vmatmul.f32.gmra.mxu0 %v667
      %v695 = vpop.f32.mrf.mxu0
      %v696 = vadd.f32 0.0, %v695
      %697 = vmatmul.f32.gmra.mxu0 %v670
      %v698 = vpop.f32.mrf.mxu0
      %v699 = vadd.f32 0.0, %v698
      %700 = vmatmul.f32.gmra.mxu0 %v673
      %v701 = vpop.f32.mrf.mxu0
      %v702 = vadd.f32 0.0, %v701
      %703 = vdwg.mxu0
      %704 = vmatpush.msra.mxu0 0.0
      %705 = vmatpush.msra.mxu0 0.0
      %706 = vmatpush.msra.mxu0 0.0
      %707 = vmatpush.msra.mxu0 0.0
      %708 = vmatpush.msra.mxu0 0.0
      %709 = vmatpush.msra.mxu0 0.0
      %710 = vmatpush.msra.mxu0 0.0
      %711 = vmatpush.msra.mxu0 0.0
      %712 = vmatpush.msra.mxu0 0.0
      %713 = vmatpush.msra.mxu0 0.0
      %714 = vmatpush.msra.mxu0 0.0
      %715 = vmatpush.msra.mxu0 0.0
      %716 = vmatpush.msra.mxu0 0.0
      %717 = vmatpush.msra.mxu0 0.0
      %718 = vmatpush.msra.mxu0 %v656
      %719 = vmatpush.msra.mxu0 %v654
      %720 = vmatmul.f32.gmra.mxu0 %v664
      %v721 = vpop.f32.mrf.mxu0
      %v722 = vadd.f32 0.0, %v721
      %723 = vmatmul.f32.gmra.mxu0 %v667
      %v724 = vpop.f32.mrf.mxu0
      %v725 = vadd.f32 0.0, %v724
      %726 = vmatmul.f32.gmra.mxu0 %v670
      %v727 = vpop.f32.mrf.mxu0
      %v728 = vadd.f32 0.0, %v727
      %729 = vmatmul.f32.gmra.mxu0 %v673
      %v730 = vpop.f32.mrf.mxu0
      %v731 = vadd.f32 0.0, %v730
      %732 = vdwg.mxu0
      %v733 = vadd.f32 %v541, %v693
      %v734 = vadd.f32 %v570, %v722
      %v735 = vadd.f32 %v544, %v696
      %v736 = vadd.f32 %v573, %v725
      %v737 = vadd.f32 %v547, %v699
      %v738 = vadd.f32 %v576, %v728
      %v739 = vadd.f32 %v550, %v702
      %v740 = vadd.f32 %v579, %v731
      %v741 = vld [vmem:[%s3] sm:$0x3]
      %v743 = vperm.slane %v741, 0
      %v744 = vperm.slane %v741, 1
      %v747 = vadd.f32 %v733, %v743
      %v748 = vadd.f32 %v734, %v744
      %v749 = vadd.f32 %v735, %v743
      %v750 = vadd.f32 %v736, %v744
      %v751 = vadd.f32 %v737, %v743
      %v752 = vadd.f32 %v738, %v744
      %v753 = vadd.f32 %v739, %v743
      %v754 = vadd.f32 %v740, %v744
      %v755 = vmul.f32 %v747, 0.5
      %v756 = vmul.f32 %v748, 0.5
      %v757 = vmul.f32 %v749, 0.5
      %v758 = vmul.f32 %v750, 0.5
      %v759 = vmul.f32 %v751, 0.5
      %v760 = vmul.f32 %v752, 0.5
      %v761 = vmul.f32 %v753, 0.5
      %v762 = vmul.f32 %v754, 0.5
      %v763 = vmul.f32 %v747, 0.70710677
      %v764 = vmul.f32 %v748, 0.70710677
      %v765 = vmul.f32 %v749, 0.70710677
      %v766 = vmul.f32 %v750, 0.70710677
      %v767 = vmul.f32 %v751, 0.70710677
      %v768 = vmul.f32 %v752, 0.70710677
      %v769 = vmul.f32 %v753, 0.70710677
      %v770 = vmul.f32 %v754, 0.70710677
      %v771 = vmul.f32 %v763, %v763
      %v772 = vmin.f32 16.0, %v771
      %v773 = vmul.f32 %v772, 2.1237322e-06
      %v774 = vadd.f32 %v773, 0.00028619796
      %v775 = vmul.f32 %v772, %v774
      %v776 = vadd.f32 %v775, 0.0036580483
      %v777 = vmul.f32 %v772, %v776
      %v778 = vadd.f32 %v777, 0.05243302
      %v779 = vmul.f32 %v772, %v778
      %v780 = vadd.f32 %v779, 0.18741608
      %v781 = vmul.f32 %v772, %v780
      %v782 = vadd.f32 %v781, 1.1283791
      %v783 = vmul.f32 %v763, %v782
      %v784 = vmul.f32 %v772, 3.8918573e-05
      %v785 = vadd.f32 %v784, 0.001143296
      %v786 = vmul.f32 %v772, %v785
      %v787 = vadd.f32 %v786, 0.014752088
      %v788 = vmul.f32 %v772, %v787
      %v789 = vadd.f32 %v788, 0.112945676
      %v790 = vmul.f32 %v772, %v789
      %v791 = vadd.f32 %v790, 0.4994258
      %v792 = vmul.f32 %v772, %v791
      %v793 = vadd.f32 %v792, 1.0
      %v794 = vrcp.pop %v793
      %v795 = vmul.f32 %v793, %v794
      %v796 = vsub.f32 1.0, %v795
      %v797 = vmul.f32 %v794, %v796
      %v798 = vadd.f32 %v794, %v797
      %vm799 = vweird.f32 %v793
      %vm800 = vweird.f32 %v794
      %vm801 = vmor %vm799, %vm800
      %v802 = vsel %vm801, %v794, %v798
      %v803 = vand.u32 2147483647, %v793
      %vm804 = vcmp.eq.f32.partialorder %v803, 8.507059e+37
      %v805 = vand.u32 %v793, 2147483648
      %v806 = vor.u32 1.1754944e-38, %v805
      %v807 = vsel %vm804, %v806, %v802
      %v808 = vmul.f32 %v783, %v807
      %v809 = vmin.f32 %v808, 1.0
      %v810 = vmax.f32 %v809, -1.0
      %v811 = vmul.f32 %v764, %v764
      %v812 = vmin.f32 16.0, %v811
      %v813 = vmul.f32 %v812, 2.1237322e-06
      %v814 = vadd.f32 %v813, 0.00028619796
      %v815 = vmul.f32 %v812, %v814
      %v816 = vadd.f32 %v815, 0.0036580483
      %v817 = vmul.f32 %v812, %v816
      %v818 = vadd.f32 %v817, 0.05243302
      %v819 = vmul.f32 %v812, %v818
      %v820 = vadd.f32 %v819, 0.18741608
      %v821 = vmul.f32 %v812, %v820
      %v822 = vadd.f32 %v821, 1.1283791
      %v823 = vmul.f32 %v764, %v822
      %v824 = vmul.f32 %v812, 3.8918573e-05
      %v825 = vadd.f32 %v824, 0.001143296
      %v826 = vmul.f32 %v812, %v825
      %v827 = vadd.f32 %v826, 0.014752088
      %v828 = vmul.f32 %v812, %v827
      %v829 = vadd.f32 %v828, 0.112945676
      %v830 = vmul.f32 %v812, %v829
      %v831 = vadd.f32 %v830, 0.4994258
      %v832 = vmul.f32 %v812, %v831
      %v833 = vadd.f32 %v832, 1.0
      %v834 = vrcp.pop %v833
      %v835 = vmul.f32 %v833, %v834
      %v836 = vsub.f32 1.0, %v835
      %v837 = vmul.f32 %v834, %v836
      %v838 = vadd.f32 %v834, %v837
      %vm839 = vweird.f32 %v833
      %vm840 = vweird.f32 %v834
      %vm841 = vmor %vm839, %vm840
      %v842 = vsel %vm841, %v834, %v838
      %v843 = vand.u32 2147483647, %v833
      %vm844 = vcmp.eq.f32.partialorder %v843, 8.507059e+37
      %v845 = vand.u32 %v833, 2147483648
      %v846 = vor.u32 1.1754944e-38, %v845
      %v847 = vsel %vm844, %v846, %v842
      %v848 = vmul.f32 %v823, %v847
      %v849 = vmin.f32 %v848, 1.0
      %v850 = vmax.f32 %v849, -1.0
      %v851 = vmul.f32 %v765, %v765
      %v852 = vmin.f32 16.0, %v851
      %v853 = vmul.f32 %v852, 2.1237322e-06
      %v854 = vadd.f32 %v853, 0.00028619796
      %v855 = vmul.f32 %v852, %v854
      %v856 = vadd.f32 %v855, 0.0036580483
      %v857 = vmul.f32 %v852, %v856
      %v858 = vadd.f32 %v857, 0.05243302
      %v859 = vmul.f32 %v852, %v858
      %v860 = vadd.f32 %v859, 0.18741608
      %v861 = vmul.f32 %v852, %v860
      %v862 = vadd.f32 %v861, 1.1283791
      %v863 = vmul.f32 %v765, %v862
      %v864 = vmul.f32 %v852, 3.8918573e-05
      %v865 = vadd.f32 %v864, 0.001143296
      %v866 = vmul.f32 %v852, %v865
      %v867 = vadd.f32 %v866, 0.014752088
      %v868 = vmul.f32 %v852, %v867
      %v869 = vadd.f32 %v868, 0.112945676
      %v870 = vmul.f32 %v852, %v869
      %v871 = vadd.f32 %v870, 0.4994258
      %v872 = vmul.f32 %v852, %v871
      %v873 = vadd.f32 %v872, 1.0
      %v874 = vrcp.pop %v873
      %v875 = vmul.f32 %v873, %v874
      %v876 = vsub.f32 1.0, %v875
      %v877 = vmul.f32 %v874, %v876
      %v878 = vadd.f32 %v874, %v877
      %vm879 = vweird.f32 %v873
      %vm880 = vweird.f32 %v874
      %vm881 = vmor %vm879, %vm880
      %v882 = vsel %vm881, %v874, %v878
      %v883 = vand.u32 2147483647, %v873
      %vm884 = vcmp.eq.f32.partialorder %v883, 8.507059e+37
      %v885 = vand.u32 %v873, 2147483648
      %v886 = vor.u32 1.1754944e-38, %v885
      %v887 = vsel %vm884, %v886, %v882
      %v888 = vmul.f32 %v863, %v887
      %v889 = vmin.f32 %v888, 1.0
      %v890 = vmax.f32 %v889, -1.0
      %v891 = vmul.f32 %v766, %v766
      %v892 = vmin.f32 16.0, %v891
      %v893 = vmul.f32 %v892, 2.1237322e-06
      %v894 = vadd.f32 %v893, 0.00028619796
      %v895 = vmul.f32 %v892, %v894
      %v896 = vadd.f32 %v895, 0.0036580483
      %v897 = vmul.f32 %v892, %v896
      %v898 = vadd.f32 %v897, 0.05243302
      %v899 = vmul.f32 %v892, %v898
      %v900 = vadd.f32 %v899, 0.18741608
      %v901 = vmul.f32 %v892, %v900
      %v902 = vadd.f32 %v901, 1.1283791
      %v903 = vmul.f32 %v766, %v902
      %v904 = vmul.f32 %v892, 3.8918573e-05
      %v905 = vadd.f32 %v904, 0.001143296
      %v906 = vmul.f32 %v892, %v905
      %v907 = vadd.f32 %v906, 0.014752088
      %v908 = vmul.f32 %v892, %v907
      %v909 = vadd.f32 %v908, 0.112945676
      %v910 = vmul.f32 %v892, %v909
      %v911 = vadd.f32 %v910, 0.4994258
      %v912 = vmul.f32 %v892, %v911
      %v913 = vadd.f32 %v912, 1.0
      %v914 = vrcp.pop %v913
      %v915 = vmul.f32 %v913, %v914
      %v916 = vsub.f32 1.0, %v915
      %v917 = vmul.f32 %v914, %v916
      %v918 = vadd.f32 %v914, %v917
      %vm919 = vweird.f32 %v913
      %vm920 = vweird.f32 %v914
      %vm921 = vmor %vm919, %vm920
      %v922 = vsel %vm921, %v914, %v918
      %v923 = vand.u32 2147483647, %v913
      %vm924 = vcmp.eq.f32.partialorder %v923, 8.507059e+37
      %v925 = vand.u32 %v913, 2147483648
      %v926 = vor.u32 1.1754944e-38, %v925
      %v927 = vsel %vm924, %v926, %v922
      %v928 = vmul.f32 %v903, %v927
      %v929 = vmin.f32 %v928, 1.0
      %v930 = vmax.f32 %v929, -1.0
      %v931 = vmul.f32 %v767, %v767
      %v932 = vmin.f32 16.0, %v931
      %v933 = vmul.f32 %v932, 2.1237322e-06
      %v934 = vadd.f32 %v933, 0.00028619796
      %v935 = vmul.f32 %v932, %v934
      %v936 = vadd.f32 %v935, 0.0036580483
      %v937 = vmul.f32 %v932, %v936
      %v938 = vadd.f32 %v937, 0.05243302
      %v939 = vmul.f32 %v932, %v938
      %v940 = vadd.f32 %v939, 0.18741608
      %v941 = vmul.f32 %v932, %v940
      %v942 = vadd.f32 %v941, 1.1283791
      %v943 = vmul.f32 %v767, %v942
      %v944 = vmul.f32 %v932, 3.8918573e-05
      %v945 = vadd.f32 %v944, 0.001143296
      %v946 = vmul.f32 %v932, %v945
      %v947 = vadd.f32 %v946, 0.014752088
      %v948 = vmul.f32 %v932, %v947
      %v949 = vadd.f32 %v948, 0.112945676
      %v950 = vmul.f32 %v932, %v949
      %v951 = vadd.f32 %v950, 0.4994258
      %v952 = vmul.f32 %v932, %v951
      %v953 = vadd.f32 %v952, 1.0
      %v954 = vrcp.pop %v953
      %v955 = vmul.f32 %v953, %v954
      %v956 = vsub.f32 1.0, %v955
      %v957 = vmul.f32 %v954, %v956
      %v958 = vadd.f32 %v954, %v957
      %vm959 = vweird.f32 %v953
      %vm960 = vweird.f32 %v954
      %vm961 = vmor %vm959, %vm960
      %v962 = vsel %vm961, %v954, %v958
      %v963 = vand.u32 2147483647, %v953
      %vm964 = vcmp.eq.f32.partialorder %v963, 8.507059e+37
      %v965 = vand.u32 %v953, 2147483648
      %v966 = vor.u32 1.1754944e-38, %v965
      %v967 = vsel %vm964, %v966, %v962
      %v968 = vmul.f32 %v943, %v967
      %v969 = vmin.f32 %v968, 1.0
      %v970 = vmax.f32 %v969, -1.0
      %v971 = vmul.f32 %v768, %v768
      %v972 = vmin.f32 16.0, %v971
      %v973 = vmul.f32 %v972, 2.1237322e-06
      %v974 = vadd.f32 %v973, 0.00028619796
      %v975 = vmul.f32 %v972, %v974
      %v976 = vadd.f32 %v975, 0.0036580483
      %v977 = vmul.f32 %v972, %v976
      %v978 = vadd.f32 %v977, 0.05243302
      %v979 = vmul.f32 %v972, %v978
      %v980 = vadd.f32 %v979, 0.18741608
      %v981 = vmul.f32 %v972, %v980
      %v982 = vadd.f32 %v981, 1.1283791
      %v983 = vmul.f32 %v768, %v982
      %v984 = vmul.f32 %v972, 3.8918573e-05
      %v985 = vadd.f32 %v984, 0.001143296
      %v986 = vmul.f32 %v972, %v985
      %v987 = vadd.f32 %v986, 0.014752088
      %v988 = vmul.f32 %v972, %v987
      %v989 = vadd.f32 %v988, 0.112945676
      %v990 = vmul.f32 %v972, %v989
      %v991 = vadd.f32 %v990, 0.4994258
      %v992 = vmul.f32 %v972, %v991
      %v993 = vadd.f32 %v992, 1.0
      %v994 = vrcp.pop %v993
      %v995 = vmul.f32 %v993, %v994
      %v996 = vsub.f32 1.0, %v995
      %v997 = vmul.f32 %v994, %v996
      %v998 = vadd.f32 %v994, %v997
      %vm999 = vweird.f32 %v993
      %vm1000 = vweird.f32 %v994
      %vm1001 = vmor %vm999, %vm1000
      %v1002 = vsel %vm1001, %v994, %v998
      %v1003 = vand.u32 2147483647, %v993
      %vm1004 = vcmp.eq.f32.partialorder %v1003, 8.507059e+37
      %v1005 = vand.u32 %v993, 2147483648
      %v1006 = vor.u32 1.1754944e-38, %v1005
      %v1007 = vsel %vm1004, %v1006, %v1002
      %v1008 = vmul.f32 %v983, %v1007
      %v1009 = vmin.f32 %v1008, 1.0
      %v1010 = vmax.f32 %v1009, -1.0
      %v1011 = vmul.f32 %v769, %v769
      %v1012 = vmin.f32 16.0, %v1011
      %v1013 = vmul.f32 %v1012, 2.1237322e-06
      %v1014 = vadd.f32 %v1013, 0.00028619796
      %v1015 = vmul.f32 %v1012, %v1014
      %v1016 = vadd.f32 %v1015, 0.0036580483
      %v1017 = vmul.f32 %v1012, %v1016
      %v1018 = vadd.f32 %v1017, 0.05243302
      %v1019 = vmul.f32 %v1012, %v1018
      %v1020 = vadd.f32 %v1019, 0.18741608
      %v1021 = vmul.f32 %v1012, %v1020
      %v1022 = vadd.f32 %v1021, 1.1283791
      %v1023 = vmul.f32 %v769, %v1022
      %v1024 = vmul.f32 %v1012, 3.8918573e-05
      %v1025 = vadd.f32 %v1024, 0.001143296
      %v1026 = vmul.f32 %v1012, %v1025
      %v1027 = vadd.f32 %v1026, 0.014752088
      %v1028 = vmul.f32 %v1012, %v1027
      %v1029 = vadd.f32 %v1028, 0.112945676
      %v1030 = vmul.f32 %v1012, %v1029
      %v1031 = vadd.f32 %v1030, 0.4994258
      %v1032 = vmul.f32 %v1012, %v1031
      %v1033 = vadd.f32 %v1032, 1.0
      %v1034 = vrcp.pop %v1033
      %v1035 = vmul.f32 %v1033, %v1034
      %v1036 = vsub.f32 1.0, %v1035
      %v1037 = vmul.f32 %v1034, %v1036
      %v1038 = vadd.f32 %v1034, %v1037
      %vm1039 = vweird.f32 %v1033
      %vm1040 = vweird.f32 %v1034
      %vm1041 = vmor %vm1039, %vm1040
      %v1042 = vsel %vm1041, %v1034, %v1038
      %v1043 = vand.u32 2147483647, %v1033
      %vm1044 = vcmp.eq.f32.partialorder %v1043, 8.507059e+37
      %v1045 = vand.u32 %v1033, 2147483648
      %v1046 = vor.u32 1.1754944e-38, %v1045
      %v1047 = vsel %vm1044, %v1046, %v1042
      %v1048 = vmul.f32 %v1023, %v1047
      %v1049 = vmin.f32 %v1048, 1.0
      %v1050 = vmax.f32 %v1049, -1.0
      %v1051 = vmul.f32 %v770, %v770
      %v1052 = vmin.f32 16.0, %v1051
      %v1053 = vmul.f32 %v1052, 2.1237322e-06
      %v1054 = vadd.f32 %v1053, 0.00028619796
      %v1055 = vmul.f32 %v1052, %v1054
      %v1056 = vadd.f32 %v1055, 0.0036580483
      %v1057 = vmul.f32 %v1052, %v1056
      %v1058 = vadd.f32 %v1057, 0.05243302
      %v1059 = vmul.f32 %v1052, %v1058
      %v1060 = vadd.f32 %v1059, 0.18741608
      %v1061 = vmul.f32 %v1052, %v1060
      %v1062 = vadd.f32 %v1061, 1.1283791
      %v1063 = vmul.f32 %v770, %v1062
      %v1064 = vmul.f32 %v1052, 3.8918573e-05
      %v1065 = vadd.f32 %v1064, 0.001143296
      %v1066 = vmul.f32 %v1052, %v1065
      %v1067 = vadd.f32 %v1066, 0.014752088
      %v1068 = vmul.f32 %v1052, %v1067
      %v1069 = vadd.f32 %v1068, 0.112945676
      %v1070 = vmul.f32 %v1052, %v1069
      %v1071 = vadd.f32 %v1070, 0.4994258
      %v1072 = vmul.f32 %v1052, %v1071
      %v1073 = vadd.f32 %v1072, 1.0
      %v1074 = vrcp.pop %v1073
      %v1075 = vmul.f32 %v1073, %v1074
      %v1076 = vsub.f32 1.0, %v1075
      %v1077 = vmul.f32 %v1074, %v1076
      %v1078 = vadd.f32 %v1074, %v1077
      %vm1079 = vweird.f32 %v1073
      %vm1080 = vweird.f32 %v1074
      %vm1081 = vmor %vm1079, %vm1080
      %v1082 = vsel %vm1081, %v1074, %v1078
      %v1083 = vand.u32 2147483647, %v1073
      %vm1084 = vcmp.eq.f32.partialorder %v1083, 8.507059e+37
      %v1085 = vand.u32 %v1073, 2147483648
      %v1086 = vor.u32 1.1754944e-38, %v1085
      %v1087 = vsel %vm1084, %v1086, %v1082
      %v1088 = vmul.f32 %v1063, %v1087
      %v1089 = vmin.f32 %v1088, 1.0
      %v1090 = vmax.f32 %v1089, -1.0
      %v1091 = vadd.f32 %v810, 1.0
      %v1092 = vadd.f32 %v850, 1.0
      %v1093 = vadd.f32 %v890, 1.0
      %v1094 = vadd.f32 %v930, 1.0
      %v1095 = vadd.f32 %v970, 1.0
      %v1096 = vadd.f32 %v1010, 1.0
      %v1097 = vadd.f32 %v1050, 1.0
      %v1098 = vadd.f32 %v1090, 1.0
      %v1099 = vmul.f32 %v755, %v1091
      %v1100 = vmul.f32 %v756, %v1092
      %v1101 = vmul.f32 %v757, %v1093
      %v1102 = vmul.f32 %v758, %v1094
      %v1103 = vmul.f32 %v759, %v1095
      %v1104 = vmul.f32 %v760, %v1096
      %v1105 = vmul.f32 %v761, %v1097
      %v1106 = vmul.f32 %v762, %v1098
      %v1107 = vpack.c.bf16 %v1101, %v1099
      %v1108 = vpack.c.bf16 %v1102, %v1100
      %v1109 = vpack.c.bf16 %v1105, %v1103
      %v1110 = vpack.c.bf16 %v1106, %v1104
      %s1111 = smul.u32 4, 3
      %s1112 = smul.u32 %s1111, 32
      %s1113 = smul.u32 %s1112, 2
      %s1114 = sshll.u32 %s1113, 4
      %1115 = dma.done [#allocation3], %s1114
      %v1116 = vld [vmem:[#allocation2] sm:$0xff]
      %v1117 = vld [vmem:[#allocation2 + $0x8] sm:$0xff]
      %v1118 = vld [vmem:[#allocation2 + $0x10] sm:$0xff]
      %v1119 = vld [vmem:[#allocation2 + $0x18] sm:$0xff]
      %v1120 = vld [vmem:[#allocation2 + $0x20] sm:$0xff]
      %v1121 = vld [vmem:[#allocation2 + $0x28] sm:$0xff]
      %v1122 = vld [vmem:[#allocation2 + $0x30] sm:$0xff]
      %v1123 = vld [vmem:[#allocation2 + $0x38] sm:$0xff]
      %v1124 = vld [vmem:[#allocation2 + $0x40] sm:$0xff]
      %v1125 = vld [vmem:[#allocation2 + $0x48] sm:$0xff]
      %v1126 = vld [vmem:[#allocation2 + $0x50] sm:$0xff]
      %v1127 = vld [vmem:[#allocation2 + $0x58] sm:$0xff]
      %v1128 = vld [vmem:[#allocation2 + $0x60] sm:$0xff]
      %v1129 = vld [vmem:[#allocation2 + $0x68] sm:$0xff]
      %v1130 = vld [vmem:[#allocation2 + $0x70] sm:$0xff]
      %v1131 = vld [vmem:[#allocation2 + $0x78] sm:$0xff]
      %v1132 = vld [vmem:[#allocation2 + $0x80] sm:$0xff]
      %v1133 = vld [vmem:[#allocation2 + $0x88] sm:$0xff]
      %v1134 = vld [vmem:[#allocation2 + $0x90] sm:$0xff]
      %v1135 = vld [vmem:[#allocation2 + $0x98] sm:$0xff]
      %v1136 = vld [vmem:[#allocation2 + $0xa0] sm:$0xff]
      %v1137 = vld [vmem:[#allocation2 + $0xa8] sm:$0xff]
      %v1138 = vld [vmem:[#allocation2 + $0xb0] sm:$0xff]
      %v1139 = vld [vmem:[#allocation2 + $0xb8] sm:$0xff]
      %v1140 = vld [vmem:[#allocation2 + $0xc0] sm:$0xff]
      %v1141 = vld [vmem:[#allocation2 + $0xc8] sm:$0xff]
      %v1142 = vld [vmem:[#allocation2 + $0xd0] sm:$0xff]
      %v1143 = vld [vmem:[#allocation2 + $0xd8] sm:$0xff]
      %v1144 = vld [vmem:[#allocation2 + $0xe0] sm:$0xff]
      %v1145 = vld [vmem:[#allocation2 + $0xe8] sm:$0xff]
      %v1146 = vld [vmem:[#allocation2 + $0xf0] sm:$0xff]
      %v1147 = vld [vmem:[#allocation2 + $0xf8] sm:$0xff]
      %v1180 = vunpack.c.l.b16 %v1116
      %v1181 = vunpack.c.h.b16 %v1116
      %v1182 = vunpack.c.l.b16 %v1117
      %v1183 = vunpack.c.h.b16 %v1117
      %v1184 = vunpack.c.l.b16 %v1118
      %v1185 = vunpack.c.h.b16 %v1118
      %v1186 = vunpack.c.l.b16 %v1119
      %v1187 = vunpack.c.h.b16 %v1119
      %v1188 = vunpack.c.l.b16 %v1120
      %v1189 = vunpack.c.h.b16 %v1120
      %v1190 = vunpack.c.l.b16 %v1121
      %v1191 = vunpack.c.h.b16 %v1121
      %v1192 = vunpack.c.l.b16 %v1122
      %v1193 = vunpack.c.h.b16 %v1122
      %v1194 = vunpack.c.l.b16 %v1123
      %v1195 = vunpack.c.h.b16 %v1123
      %v1196 = vunpack.c.l.b16 %v1124
      %v1197 = vunpack.c.h.b16 %v1124
      %v1198 = vunpack.c.l.b16 %v1125
      %v1199 = vunpack.c.h.b16 %v1125
      %v1200 = vunpack.c.l.b16 %v1126
      %v1201 = vunpack.c.h.b16 %v1126
      %v1202 = vunpack.c.l.b16 %v1127
      %v1203 = vunpack.c.h.b16 %v1127
      %v1204 = vunpack.c.l.b16 %v1128
      %v1205 = vunpack.c.h.b16 %v1128
      %v1206 = vunpack.c.l.b16 %v1129
      %v1207 = vunpack.c.h.b16 %v1129
      %v1208 = vunpack.c.l.b16 %v1130
      %v1209 = vunpack.c.h.b16 %v1130
      %v1210 = vunpack.c.l.b16 %v1131
      %v1211 = vunpack.c.h.b16 %v1131
      %v1212 = vunpack.c.l.b16 %v1132
      %v1213 = vunpack.c.h.b16 %v1132
      %v1214 = vunpack.c.l.b16 %v1133
      %v1215 = vunpack.c.h.b16 %v1133
      %v1216 = vunpack.c.l.b16 %v1134
      %v1217 = vunpack.c.h.b16 %v1134
      %v1218 = vunpack.c.l.b16 %v1135
      %v1219 = vunpack.c.h.b16 %v1135
      %v1220 = vunpack.c.l.b16 %v1136
      %v1221 = vunpack.c.h.b16 %v1136
      %v1222 = vunpack.c.l.b16 %v1137
      %v1223 = vunpack.c.h.b16 %v1137
      %v1224 = vunpack.c.l.b16 %v1138
      %v1225 = vunpack.c.h.b16 %v1138
      %v1226 = vunpack.c.l.b16 %v1139
      %v1227 = vunpack.c.h.b16 %v1139
      %v1228 = vunpack.c.l.b16 %v1140
      %v1229 = vunpack.c.h.b16 %v1140
      %v1230 = vunpack.c.l.b16 %v1141
      %v1231 = vunpack.c.h.b16 %v1141
      %v1232 = vunpack.c.l.b16 %v1142
      %v1233 = vunpack.c.h.b16 %v1142
      %v1234 = vunpack.c.l.b16 %v1143
      %v1235 = vunpack.c.h.b16 %v1143
      %v1236 = vunpack.c.l.b16 %v1144
      %v1237 = vunpack.c.h.b16 %v1144
      %v1238 = vunpack.c.l.b16 %v1145
      %v1239 = vunpack.c.h.b16 %v1145
      %v1240 = vunpack.c.l.b16 %v1146
      %v1241 = vunpack.c.h.b16 %v1146
      %v1242 = vunpack.c.l.b16 %v1147
      %v1243 = vunpack.c.h.b16 %v1147
      %v1244 = vpack.c.b16 %v1182, %v1180
      %v1245 = vpack.c.b16 %v1183, %v1181
      %v1246 = vpack.c.b16 %v1186, %v1184
      %v1247 = vpack.c.b16 %v1187, %v1185
      %v1248 = vpack.c.b16 %v1190, %v1188
      %v1249 = vpack.c.b16 %v1191, %v1189
      %v1250 = vpack.c.b16 %v1194, %v1192
      %v1251 = vpack.c.b16 %v1195, %v1193
      %v1252 = vpack.c.b16 %v1198, %v1196
      %v1253 = vpack.c.b16 %v1199, %v1197
      %v1254 = vpack.c.b16 %v1202, %v1200
      %v1255 = vpack.c.b16 %v1203, %v1201
      %v1256 = vpack.c.b16 %v1206, %v1204
      %v1257 = vpack.c.b16 %v1207, %v1205
      %v1258 = vpack.c.b16 %v1210, %v1208
      %v1259 = vpack.c.b16 %v1211, %v1209
      %v1260 = vpack.c.b16 %v1214, %v1212
      %v1261 = vpack.c.b16 %v1215, %v1213
      %v1262 = vpack.c.b16 %v1218, %v1216
      %v1263 = vpack.c.b16 %v1219, %v1217
      %v1264 = vpack.c.b16 %v1222, %v1220
      %v1265 = vpack.c.b16 %v1223, %v1221
      %v1266 = vpack.c.b16 %v1226, %v1224
      %v1267 = vpack.c.b16 %v1227, %v1225
      %v1268 = vpack.c.b16 %v1230, %v1228
      %v1269 = vpack.c.b16 %v1231, %v1229
      %v1270 = vpack.c.b16 %v1234, %v1232
      %v1271 = vpack.c.b16 %v1235, %v1233
      %v1272 = vpack.c.b16 %v1238, %v1236
      %v1273 = vpack.c.b16 %v1239, %v1237
      %v1274 = vpack.c.b16 %v1242, %v1240
      %v1275 = vpack.c.b16 %v1243, %v1241
      %1308 = vmatpush.bf16.msra.mxu0 %v1258
      %1309 = vmatpush.bf16.msra.mxu0 %v1256
      %1310 = vmatpush.bf16.msra.mxu0 %v1254
      %1311 = vmatpush.bf16.msra.mxu0 %v1252
      %1312 = vmatpush.bf16.msra.mxu0 %v1250
      %1313 = vmatpush.bf16.msra.mxu0 %v1248
      %1314 = vmatpush.bf16.msra.mxu0 %v1246
      %1315 = vmatpush.bf16.msra.mxu0 %v1244
      %1316 = vmatmul.bf16.gmra.mxu0 %v1107
      %v1317 = vpop.f32.mrf.mxu0
      %v1318 = vadd.f32 0.0, %v1317
      %v1319 = vpop.f32.mrf.mxu0
      %v1320 = vadd.f32 0.0, %v1319
      %1321 = vmatmul.bf16.gmra.mxu0 %v1109
      %v1322 = vpop.f32.mrf.mxu0
      %v1323 = vadd.f32 0.0, %v1322
      %v1324 = vpop.f32.mrf.mxu0
      %v1325 = vadd.f32 0.0, %v1324
      %1326 = vdwg.mxu0
      %1327 = vmatpush.bf16.msra.mxu0 %v1274
      %1328 = vmatpush.bf16.msra.mxu0 %v1272
      %1329 = vmatpush.bf16.msra.mxu0 %v1270
      %1330 = vmatpush.bf16.msra.mxu0 %v1268
      %1331 = vmatpush.bf16.msra.mxu0 %v1266
      %1332 = vmatpush.bf16.msra.mxu0 %v1264
      %1333 = vmatpush.bf16.msra.mxu0 %v1262
      %1334 = vmatpush.bf16.msra.mxu0 %v1260
      %1335 = vmatmul.bf16.gmra.mxu0 %v1108
      %v1336 = vpop.f32.mrf.mxu0
      %v1337 = vadd.f32 %v1318, %v1336
      %v1338 = vpop.f32.mrf.mxu0
      %v1339 = vadd.f32 %v1320, %v1338
      %1340 = vmatmul.bf16.gmra.mxu0 %v1110
      %v1341 = vpop.f32.mrf.mxu0
      %v1342 = vadd.f32 %v1323, %v1341
      %v1343 = vpop.f32.mrf.mxu0
      %v1344 = vadd.f32 %v1325, %v1343
      %1345 = vdwg.mxu0
      %1346 = vmatpush.bf16.msra.mxu0 %v1259
      %1347 = vmatpush.bf16.msra.mxu0 %v1257
      %1348 = vmatpush.bf16.msra.mxu0 %v1255
      %1349 = vmatpush.bf16.msra.mxu0 %v1253
      %1350 = vmatpush.bf16.msra.mxu0 %v1251
      %1351 = vmatpush.bf16.msra.mxu0 %v1249
      %1352 = vmatpush.bf16.msra.mxu0 %v1247
      %1353 = vmatpush.bf16.msra.mxu0 %v1245
      %1354 = vmatmul.bf16.gmra.mxu0 %v1107
      %v1355 = vpop.f32.mrf.mxu0
      %v1356 = vadd.f32 0.0, %v1355
      %v1357 = vpop.f32.mrf.mxu0
      %v1358 = vadd.f32 0.0, %v1357
      %1359 = vmatmul.bf16.gmra.mxu0 %v1109
      %v1360 = vpop.f32.mrf.mxu0
      %v1361 = vadd.f32 0.0, %v1360
      %v1362 = vpop.f32.mrf.mxu0
      %v1363 = vadd.f32 0.0, %v1362
      %1364 = vdwg.mxu0
      %1365 = vmatpush.bf16.msra.mxu0 %v1275
      %1366 = vmatpush.bf16.msra.mxu0 %v1273
      %1367 = vmatpush.bf16.msra.mxu0 %v1271
      %1368 = vmatpush.bf16.msra.mxu0 %v1269
      %1369 = vmatpush.bf16.msra.mxu0 %v1267
      %1370 = vmatpush.bf16.msra.mxu0 %v1265
      %1371 = vmatpush.bf16.msra.mxu0 %v1263
      %1372 = vmatpush.bf16.msra.mxu0 %v1261
      %1373 = vmatmul.bf16.gmra.mxu0 %v1108
      %v1374 = vpop.f32.mrf.mxu0
      %v1375 = vadd.f32 %v1356, %v1374
      %v1376 = vpop.f32.mrf.mxu0
      %v1377 = vadd.f32 %v1358, %v1376
      %1378 = vmatmul.bf16.gmra.mxu0 %v1110
      %v1379 = vpop.f32.mrf.mxu0
      %v1380 = vadd.f32 %v1361, %v1379
      %v1381 = vpop.f32.mrf.mxu0
      %v1382 = vadd.f32 %v1363, %v1381
      %1383 = vdwg.mxu0
      %v1384 = vld [vmem:[%s4] sm:$0xff]
      %v1385 = vld [vmem:[%s4 + $0x8] sm:$0xff]
      %v1386 = vld [vmem:[%s4 + $0x10] sm:$0xff]
      %v1387 = vld [vmem:[%s4 + $0x18] sm:$0xff]
      %v1388 = vld [vmem:[%s4 + $0x20] sm:$0xff]
      %v1389 = vld [vmem:[%s4 + $0x28] sm:$0xff]
      %v1390 = vld [vmem:[%s4 + $0x30] sm:$0xff]
      %v1391 = vld [vmem:[%s4 + $0x38] sm:$0xff]
      %s1392 = scalar_lea.vmem [#allocation2], 256
      %v1393 = vld [vmem:[%s1392] sm:$0xff]
      %v1394 = vld [vmem:[%s1392 + $0x8] sm:$0xff]
      %v1395 = vld [vmem:[%s1392 + $0x10] sm:$0xff]
      %v1396 = vld [vmem:[%s1392 + $0x18] sm:$0xff]
      %v1397 = vld [vmem:[%s1392 + $0x20] sm:$0xff]
      %v1398 = vld [vmem:[%s1392 + $0x28] sm:$0xff]
      %v1399 = vld [vmem:[%s1392 + $0x30] sm:$0xff]
      %v1400 = vld [vmem:[%s1392 + $0x38] sm:$0xff]
      %v1401 = vld [vmem:[%s1392 + $0x40] sm:$0xff]
      %v1402 = vld [vmem:[%s1392 + $0x48] sm:$0xff]
      %v1403 = vld [vmem:[%s1392 + $0x50] sm:$0xff]
      %v1404 = vld [vmem:[%s1392 + $0x58] sm:$0xff]
      %v1405 = vld [vmem:[%s1392 + $0x60] sm:$0xff]
      %v1406 = vld [vmem:[%s1392 + $0x68] sm:$0xff]
      %v1407 = vld [vmem:[%s1392 + $0x70] sm:$0xff]
      %v1408 = vld [vmem:[%s1392 + $0x78] sm:$0xff]
      %v1409 = vld [vmem:[%s1392 + $0x80] sm:$0xff]
      %v1410 = vld [vmem:[%s1392 + $0x88] sm:$0xff]
      %v1411 = vld [vmem:[%s1392 + $0x90] sm:$0xff]
      %v1412 = vld [vmem:[%s1392 + $0x98] sm:$0xff]
      %v1413 = vld [vmem:[%s1392 + $0xa0] sm:$0xff]
      %v1414 = vld [vmem:[%s1392 + $0xa8] sm:$0xff]
      %v1415 = vld [vmem:[%s1392 + $0xb0] sm:$0xff]
      %v1416 = vld [vmem:[%s1392 + $0xb8] sm:$0xff]
      %v1417 = vld [vmem:[%s1392 + $0xc0] sm:$0xff]
      %v1418 = vld [vmem:[%s1392 + $0xc8] sm:$0xff]
      %v1419 = vld [vmem:[%s1392 + $0xd0] sm:$0xff]
      %v1420 = vld [vmem:[%s1392 + $0xd8] sm:$0xff]
      %v1421 = vld [vmem:[%s1392 + $0xe0] sm:$0xff]
      %v1422 = vld [vmem:[%s1392 + $0xe8] sm:$0xff]
      %v1423 = vld [vmem:[%s1392 + $0xf0] sm:$0xff]
      %v1424 = vld [vmem:[%s1392 + $0xf8] sm:$0xff]
      %v1457 = vunpack.c.l.b16 %v1393
      %v1458 = vunpack.c.h.b16 %v1393
      %v1459 = vunpack.c.l.b16 %v1394
      %v1460 = vunpack.c.h.b16 %v1394
      %v1461 = vunpack.c.l.b16 %v1395
      %v1462 = vunpack.c.h.b16 %v1395
      %v1463 = vunpack.c.l.b16 %v1396
      %v1464 = vunpack.c.h.b16 %v1396
      %v1465 = vunpack.c.l.b16 %v1397
      %v1466 = vunpack.c.h.b16 %v1397
      %v1467 = vunpack.c.l.b16 %v1398
      %v1468 = vunpack.c.h.b16 %v1398
      %v1469 = vunpack.c.l.b16 %v1399
      %v1470 = vunpack.c.h.b16 %v1399
      %v1471 = vunpack.c.l.b16 %v1400
      %v1472 = vunpack.c.h.b16 %v1400
      %v1473 = vunpack.c.l.b16 %v1401
      %v1474 = vunpack.c.h.b16 %v1401
      %v1475 = vunpack.c.l.b16 %v1402
      %v1476 = vunpack.c.h.b16 %v1402
      %v1477 = vunpack.c.l.b16 %v1403
      %v1478 = vunpack.c.h.b16 %v1403
      %v1479 = vunpack.c.l.b16 %v1404
      %v1480 = vunpack.c.h.b16 %v1404
      %v1481 = vunpack.c.l.b16 %v1405
      %v1482 = vunpack.c.h.b16 %v1405
      %v1483 = vunpack.c.l.b16 %v1406
      %v1484 = vunpack.c.h.b16 %v1406
      %v1485 = vunpack.c.l.b16 %v1407
      %v1486 = vunpack.c.h.b16 %v1407
      %v1487 = vunpack.c.l.b16 %v1408
      %v1488 = vunpack.c.h.b16 %v1408
      %v1489 = vunpack.c.l.b16 %v1409
      %v1490 = vunpack.c.h.b16 %v1409
      %v1491 = vunpack.c.l.b16 %v1410
      %v1492 = vunpack.c.h.b16 %v1410
      %v1493 = vunpack.c.l.b16 %v1411
      %v1494 = vunpack.c.h.b16 %v1411
      %v1495 = vunpack.c.l.b16 %v1412
      %v1496 = vunpack.c.h.b16 %v1412
      %v1497 = vunpack.c.l.b16 %v1413
      %v1498 = vunpack.c.h.b16 %v1413
      %v1499 = vunpack.c.l.b16 %v1414
      %v1500 = vunpack.c.h.b16 %v1414
      %v1501 = vunpack.c.l.b16 %v1415
      %v1502 = vunpack.c.h.b16 %v1415
      %v1503 = vunpack.c.l.b16 %v1416
      %v1504 = vunpack.c.h.b16 %v1416
      %v1505 = vunpack.c.l.b16 %v1417
      %v1506 = vunpack.c.h.b16 %v1417
      %v1507 = vunpack.c.l.b16 %v1418
      %v1508 = vunpack.c.h.b16 %v1418
      %v1509 = vunpack.c.l.b16 %v1419
      %v1510 = vunpack.c.h.b16 %v1419
      %v1511 = vunpack.c.l.b16 %v1420
      %v1512 = vunpack.c.h.b16 %v1420
      %v1513 = vunpack.c.l.b16 %v1421
      %v1514 = vunpack.c.h.b16 %v1421
      %v1515 = vunpack.c.l.b16 %v1422
      %v1516 = vunpack.c.h.b16 %v1422
      %v1517 = vunpack.c.l.b16 %v1423
      %v1518 = vunpack.c.h.b16 %v1423
      %v1519 = vunpack.c.l.b16 %v1424
      %v1520 = vunpack.c.h.b16 %v1424
      %v1521 = vpack.c.b16 %v1459, %v1457
      %v1522 = vpack.c.b16 %v1460, %v1458
      %v1523 = vpack.c.b16 %v1463, %v1461
      %v1524 = vpack.c.b16 %v1464, %v1462
      %v1525 = vpack.c.b16 %v1467, %v1465
      %v1526 = vpack.c.b16 %v1468, %v1466
      %v1527 = vpack.c.b16 %v1471, %v1469
      %v1528 = vpack.c.b16 %v1472, %v1470
      %v1529 = vpack.c.b16 %v1475, %v1473
      %v1530 = vpack.c.b16 %v1476, %v1474
      %v1531 = vpack.c.b16 %v1479, %v1477
      %v1532 = vpack.c.b16 %v1480, %v1478
      %v1533 = vpack.c.b16 %v1483, %v1481
      %v1534 = vpack.c.b16 %v1484, %v1482
      %v1535 = vpack.c.b16 %v1487, %v1485
      %v1536 = vpack.c.b16 %v1488, %v1486
      %v1537 = vpack.c.b16 %v1491, %v1489
      %v1538 = vpack.c.b16 %v1492, %v1490
      %v1539 = vpack.c.b16 %v1495, %v1493
      %v1540 = vpack.c.b16 %v1496, %v1494
      %v1541 = vpack.c.b16 %v1499, %v1497
      %v1542 = vpack.c.b16 %v1500, %v1498
      %v1543 = vpack.c.b16 %v1503, %v1501
      %v1544 = vpack.c.b16 %v1504, %v1502
      %v1545 = vpack.c.b16 %v1507, %v1505
      %v1546 = vpack.c.b16 %v1508, %v1506
      %v1547 = vpack.c.b16 %v1511, %v1509
      %v1548 = vpack.c.b16 %v1512, %v1510
      %v1549 = vpack.c.b16 %v1515, %v1513
      %v1550 = vpack.c.b16 %v1516, %v1514
      %v1551 = vpack.c.b16 %v1519, %v1517
      %v1552 = vpack.c.b16 %v1520, %v1518
      %1585 = vmatpush.bf16.msra.mxu0 %v1535
      %1586 = vmatpush.bf16.msra.mxu0 %v1533
      %1587 = vmatpush.bf16.msra.mxu0 %v1531
      %1588 = vmatpush.bf16.msra.mxu0 %v1529
      %1589 = vmatpush.bf16.msra.mxu0 %v1527
      %1590 = vmatpush.bf16.msra.mxu0 %v1525
      %1591 = vmatpush.bf16.msra.mxu0 %v1523
      %1592 = vmatpush.bf16.msra.mxu0 %v1521
      %1593 = vmatmul.bf16.gmra.mxu0 %v1107
      %v1594 = vpop.f32.mrf.mxu0
      %v1595 = vadd.f32 0.0, %v1594
      %v1596 = vpop.f32.mrf.mxu0
      %v1597 = vadd.f32 0.0, %v1596
      %1598 = vmatmul.bf16.gmra.mxu0 %v1109
      %v1599 = vpop.f32.mrf.mxu0
      %v1600 = vadd.f32 0.0, %v1599
      %v1601 = vpop.f32.mrf.mxu0
      %v1602 = vadd.f32 0.0, %v1601
      %1603 = vdwg.mxu0
      %1604 = vmatpush.bf16.msra.mxu0 %v1551
      %1605 = vmatpush.bf16.msra.mxu0 %v1549
      %1606 = vmatpush.bf16.msra.mxu0 %v1547
      %1607 = vmatpush.bf16.msra.mxu0 %v1545
      %1608 = vmatpush.bf16.msra.mxu0 %v1543
      %1609 = vmatpush.bf16.msra.mxu0 %v1541
      %1610 = vmatpush.bf16.msra.mxu0 %v1539
      %1611 = vmatpush.bf16.msra.mxu0 %v1537
      %1612 = vmatmul.bf16.gmra.mxu0 %v1108
      %v1613 = vpop.f32.mrf.mxu0
      %v1614 = vadd.f32 %v1595, %v1613
      %v1615 = vpop.f32.mrf.mxu0
      %v1616 = vadd.f32 %v1597, %v1615
      %1617 = vmatmul.bf16.gmra.mxu0 %v1110
      %v1618 = vpop.f32.mrf.mxu0
      %v1619 = vadd.f32 %v1600, %v1618
      %v1620 = vpop.f32.mrf.mxu0
      %v1621 = vadd.f32 %v1602, %v1620
      %1622 = vdwg.mxu0
      %1623 = vmatpush.bf16.msra.mxu0 %v1536
      %1624 = vmatpush.bf16.msra.mxu0 %v1534
      %1625 = vmatpush.bf16.msra.mxu0 %v1532
      %1626 = vmatpush.bf16.msra.mxu0 %v1530
      %1627 = vmatpush.bf16.msra.mxu0 %v1528
      %1628 = vmatpush.bf16.msra.mxu0 %v1526
      %1629 = vmatpush.bf16.msra.mxu0 %v1524
      %1630 = vmatpush.bf16.msra.mxu0 %v1522
      %1631 = vmatmul.bf16.gmra.mxu0 %v1107
      %v1632 = vpop.f32.mrf.mxu0
      %v1633 = vadd.f32 0.0, %v1632
      %v1634 = vpop.f32.mrf.mxu0
      %v1635 = vadd.f32 0.0, %v1634
      %1636 = vmatmul.bf16.gmra.mxu0 %v1109
      %v1637 = vpop.f32.mrf.mxu0
      %v1638 = vadd.f32 0.0, %v1637
      %v1639 = vpop.f32.mrf.mxu0
      %v1640 = vadd.f32 0.0, %v1639
      %1641 = vdwg.mxu0
      %1642 = vmatpush.bf16.msra.mxu0 %v1552
      %1643 = vmatpush.bf16.msra.mxu0 %v1550
      %1644 = vmatpush.bf16.msra.mxu0 %v1548
      %1645 = vmatpush.bf16.msra.mxu0 %v1546
      %1646 = vmatpush.bf16.msra.mxu0 %v1544
      %1647 = vmatpush.bf16.msra.mxu0 %v1542
      %1648 = vmatpush.bf16.msra.mxu0 %v1540
      %1649 = vmatpush.bf16.msra.mxu0 %v1538
      %1650 = vmatmul.bf16.gmra.mxu0 %v1108
      %v1651 = vpop.f32.mrf.mxu0
      %v1652 = vadd.f32 %v1633, %v1651
      %v1653 = vpop.f32.mrf.mxu0
      %v1654 = vadd.f32 %v1635, %v1653
      %1655 = vmatmul.bf16.gmra.mxu0 %v1110
      %v1656 = vpop.f32.mrf.mxu0
      %v1657 = vadd.f32 %v1638, %v1656
      %v1658 = vpop.f32.mrf.mxu0
      %v1659 = vadd.f32 %v1640, %v1658
      %1660 = vdwg.mxu0
      %s1661 = scalar_lea.vmem %s4, 64
      %v1662 = vld [vmem:[%s1661] sm:$0xff]
      %v1663 = vld [vmem:[%s1661 + $0x8] sm:$0xff]
      %v1664 = vld [vmem:[%s1661 + $0x10] sm:$0xff]
      %v1665 = vld [vmem:[%s1661 + $0x18] sm:$0xff]
      %v1666 = vld [vmem:[%s1661 + $0x20] sm:$0xff]
      %v1667 = vld [vmem:[%s1661 + $0x28] sm:$0xff]
      %v1668 = vld [vmem:[%s1661 + $0x30] sm:$0xff]
      %v1669 = vld [vmem:[%s1661 + $0x38] sm:$0xff]
      %vm1670 = vcmask 261120
      %v1672 = vsel %vm1670, %v1662, 0
      %v1675 = vsel %vm1670, %v1663, 0
      %v1678 = vsel %vm1670, %v1664, 0
      %v1681 = vsel %vm1670, %v1665, 0
      %v1684 = vsel %vm1670, %v1666, 0
      %v1687 = vsel %vm1670, %v1667, 0
      %v1690 = vsel %vm1670, %v1668, 0
      %v1693 = vsel %vm1670, %v1669, 0
      %1695 = vmatpush.msra.mxu0 0.0
      %1696 = vmatpush.msra.mxu0 0.0
      %1697 = vmatpush.msra.mxu0 0.0
      %1698 = vmatpush.msra.mxu0 0.0
      %1699 = vmatpush.msra.mxu0 0.0
      %1700 = vmatpush.msra.mxu0 0.0
      %1701 = vmatpush.msra.mxu0 0.0
      %1702 = vmatpush.msra.mxu0 0.0
      %1703 = vmatpush.msra.mxu0 0.0
      %1704 = vmatpush.msra.mxu0 0.0
      %1705 = vmatpush.msra.mxu0 0.0
      %1706 = vmatpush.msra.mxu0 0.0
      %1707 = vmatpush.msra.mxu0 %v1621
      %1708 = vmatpush.msra.mxu0 %v1619
      %1709 = vmatpush.msra.mxu0 %v1616
      %1710 = vmatpush.msra.mxu0 %v1614
      %1711 = vmatmul.f32.gmra.mxu0 %v1672
      %v1712 = vpop.f32.mrf.mxu0
      %v1713 = vadd.f32 0.0, %v1712
      %1714 = vmatmul.f32.gmra.mxu0 %v1675
      %v1715 = vpop.f32.mrf.mxu0
      %v1716 = vadd.f32 0.0, %v1715
      %1717 = vmatmul.f32.gmra.mxu0 %v1678
      %v1718 = vpop.f32.mrf.mxu0
      %v1719 = vadd.f32 0.0, %v1718
      %1720 = vmatmul.f32.gmra.mxu0 %v1681
      %v1721 = vpop.f32.mrf.mxu0
      %v1722 = vadd.f32 0.0, %v1721
      %1723 = vmatmul.f32.gmra.mxu0 %v1684
      %v1724 = vpop.f32.mrf.mxu0
      %v1725 = vadd.f32 0.0, %v1724
      %1726 = vmatmul.f32.gmra.mxu0 %v1687
      %v1727 = vpop.f32.mrf.mxu0
      %v1728 = vadd.f32 0.0, %v1727
      %1729 = vmatmul.f32.gmra.mxu0 %v1690
      %v1730 = vpop.f32.mrf.mxu0
      %v1731 = vadd.f32 0.0, %v1730
      %1732 = vmatmul.f32.gmra.mxu0 %v1693
      %v1733 = vpop.f32.mrf.mxu0
      %v1734 = vadd.f32 0.0, %v1733
      %1735 = vdwg.mxu0
      %1736 = vmatpush.msra.mxu0 0.0
      %1737 = vmatpush.msra.mxu0 0.0
      %1738 = vmatpush.msra.mxu0 0.0
      %1739 = vmatpush.msra.mxu0 0.0
      %1740 = vmatpush.msra.mxu0 0.0
      %1741 = vmatpush.msra.mxu0 0.0
      %1742 = vmatpush.msra.mxu0 0.0
      %1743 = vmatpush.msra.mxu0 0.0
      %1744 = vmatpush.msra.mxu0 0.0
      %1745 = vmatpush.msra.mxu0 0.0
      %1746 = vmatpush.msra.mxu0 0.0
      %1747 = vmatpush.msra.mxu0 0.0
      %1748 = vmatpush.msra.mxu0 %v1659
      %1749 = vmatpush.msra.mxu0 %v1657
      %1750 = vmatpush.msra.mxu0 %v1654
      %1751 = vmatpush.msra.mxu0 %v1652
      %1752 = vmatmul.f32.gmra.mxu0 %v1672
      %v1753 = vpop.f32.mrf.mxu0
      %v1754 = vadd.f32 0.0, %v1753
      %1755 = vmatmul.f32.gmra.mxu0 %v1675
      %v1756 = vpop.f32.mrf.mxu0
      %v1757 = vadd.f32 0.0, %v1756
      %1758 = vmatmul.f32.gmra.mxu0 %v1678
      %v1759 = vpop.f32.mrf.mxu0
      %v1760 = vadd.f32 0.0, %v1759
      %1761 = vmatmul.f32.gmra.mxu0 %v1681
      %v1762 = vpop.f32.mrf.mxu0
      %v1763 = vadd.f32 0.0, %v1762
      %1764 = vmatmul.f32.gmra.mxu0 %v1684
      %v1765 = vpop.f32.mrf.mxu0
      %v1766 = vadd.f32 0.0, %v1765
      %1767 = vmatmul.f32.gmra.mxu0 %v1687
      %v1768 = vpop.f32.mrf.mxu0
      %v1769 = vadd.f32 0.0, %v1768
      %1770 = vmatmul.f32.gmra.mxu0 %v1690
      %v1771 = vpop.f32.mrf.mxu0
      %v1772 = vadd.f32 0.0, %v1771
      %1773 = vmatmul.f32.gmra.mxu0 %v1693
      %v1774 = vpop.f32.mrf.mxu0
      %v1775 = vadd.f32 0.0, %v1774
      %1776 = vdwg.mxu0
      %v1778 = vsel %vm1670, %v1384, 0
      %v1781 = vsel %vm1670, %v1385, 0
      %v1784 = vsel %vm1670, %v1386, 0
      %v1787 = vsel %vm1670, %v1387, 0
      %v1790 = vsel %vm1670, %v1388, 0
      %v1793 = vsel %vm1670, %v1389, 0
      %v1796 = vsel %vm1670, %v1390, 0
      %v1799 = vsel %vm1670, %v1391, 0
      %1801 = vmatpush.msra.mxu0 0.0
      %1802 = vmatpush.msra.mxu0 0.0
      %1803 = vmatpush.msra.mxu0 0.0
      %1804 = vmatpush.msra.mxu0 0.0
      %1805 = vmatpush.msra.mxu0 0.0
      %1806 = vmatpush.msra.mxu0 0.0
      %1807 = vmatpush.msra.mxu0 0.0
      %1808 = vmatpush.msra.mxu0 0.0
      %1809 = vmatpush.msra.mxu0 0.0
      %1810 = vmatpush.msra.mxu0 0.0
      %1811 = vmatpush.msra.mxu0 0.0
      %1812 = vmatpush.msra.mxu0 0.0
      %1813 = vmatpush.msra.mxu0 %v1344
      %1814 = vmatpush.msra.mxu0 %v1342
      %1815 = vmatpush.msra.mxu0 %v1339
      %1816 = vmatpush.msra.mxu0 %v1337
      %1817 = vmatmul.f32.gmra.mxu0 %v1778
      %v1818 = vpop.f32.mrf.mxu0
      %v1819 = vadd.f32 %v1713, %v1818
      %1820 = vmatmul.f32.gmra.mxu0 %v1781
      %v1821 = vpop.f32.mrf.mxu0
      %v1822 = vadd.f32 %v1716, %v1821
      %1823 = vmatmul.f32.gmra.mxu0 %v1784
      %v1824 = vpop.f32.mrf.mxu0
      %v1825 = vadd.f32 %v1719, %v1824
      %1826 = vmatmul.f32.gmra.mxu0 %v1787
      %v1827 = vpop.f32.mrf.mxu0
      %v1828 = vadd.f32 %v1722, %v1827
      %1829 = vmatmul.f32.gmra.mxu0 %v1790
      %v1830 = vpop.f32.mrf.mxu0
      %v1831 = vadd.f32 %v1725, %v1830
      %1832 = vmatmul.f32.gmra.mxu0 %v1793
      %v1833 = vpop.f32.mrf.mxu0
      %v1834 = vadd.f32 %v1728, %v1833
      %1835 = vmatmul.f32.gmra.mxu0 %v1796
      %v1836 = vpop.f32.mrf.mxu0
      %v1837 = vadd.f32 %v1731, %v1836
      %1838 = vmatmul.f32.gmra.mxu0 %v1799
      %v1839 = vpop.f32.mrf.mxu0
      %v1840 = vadd.f32 %v1734, %v1839
      %1841 = vdwg.mxu0
      %1842 = vmatpush.msra.mxu0 0.0
      %1843 = vmatpush.msra.mxu0 0.0
      %1844 = vmatpush.msra.mxu0 0.0
      %1845 = vmatpush.msra.mxu0 0.0
      %1846 = vmatpush.msra.mxu0 0.0
      %1847 = vmatpush.msra.mxu0 0.0
      %1848 = vmatpush.msra.mxu0 0.0
      %1849 = vmatpush.msra.mxu0 0.0
      %1850 = vmatpush.msra.mxu0 0.0
      %1851 = vmatpush.msra.mxu0 0.0
      %1852 = vmatpush.msra.mxu0 0.0
      %1853 = vmatpush.msra.mxu0 0.0
      %1854 = vmatpush.msra.mxu0 %v1382
      %1855 = vmatpush.msra.mxu0 %v1380
      %1856 = vmatpush.msra.mxu0 %v1377
      %1857 = vmatpush.msra.mxu0 %v1375
      %1858 = vmatmul.f32.gmra.mxu0 %v1778
      %v1859 = vpop.f32.mrf.mxu0
      %v1860 = vadd.f32 %v1754, %v1859
      %1861 = vmatmul.f32.gmra.mxu0 %v1781
      %v1862 = vpop.f32.mrf.mxu0
      %v1863 = vadd.f32 %v1757, %v1862
      %1864 = vmatmul.f32.gmra.mxu0 %v1784
      %v1865 = vpop.f32.mrf.mxu0
      %v1866 = vadd.f32 %v1760, %v1865
      %1867 = vmatmul.f32.gmra.mxu0 %v1787
      %v1868 = vpop.f32.mrf.mxu0
      %v1869 = vadd.f32 %v1763, %v1868
      %1870 = vmatmul.f32.gmra.mxu0 %v1790
      %v1871 = vpop.f32.mrf.mxu0
      %v1872 = vadd.f32 %v1766, %v1871
      %1873 = vmatmul.f32.gmra.mxu0 %v1793
      %v1874 = vpop.f32.mrf.mxu0
      %v1875 = vadd.f32 %v1769, %v1874
      %1876 = vmatmul.f32.gmra.mxu0 %v1796
      %v1877 = vpop.f32.mrf.mxu0
      %v1878 = vadd.f32 %v1772, %v1877
      %1879 = vmatmul.f32.gmra.mxu0 %v1799
      %v1880 = vpop.f32.mrf.mxu0
      %v1881 = vadd.f32 %v1775, %v1880
      %1882 = vdwg.mxu0
      %s1883 = scalar_lea.vmem [#allocation2], 512
      %v1884 = vld [vmem:[%s1883] sm:$0xff]
      %v1885 = vld [vmem:[%s1883 + $0x8] sm:$0xff]
      %v1886 = vld [vmem:[%s1883 + $0x10] sm:$0xff]
      %v1887 = vld [vmem:[%s1883 + $0x18] sm:$0xff]
      %v1888 = vld [vmem:[%s1883 + $0x20] sm:$0xff]
      %v1889 = vld [vmem:[%s1883 + $0x28] sm:$0xff]
      %v1890 = vld [vmem:[%s1883 + $0x30] sm:$0xff]
      %v1891 = vld [vmem:[%s1883 + $0x38] sm:$0xff]
      %v1892 = vld [vmem:[%s1883 + $0x40] sm:$0xff]
      %v1893 = vld [vmem:[%s1883 + $0x48] sm:$0xff]
      %v1894 = vld [vmem:[%s1883 + $0x50] sm:$0xff]
      %v1895 = vld [vmem:[%s1883 + $0x58] sm:$0xff]
      %v1896 = vld [vmem:[%s1883 + $0x60] sm:$0xff]
      %v1897 = vld [vmem:[%s1883 + $0x68] sm:$0xff]
      %v1898 = vld [vmem:[%s1883 + $0x70] sm:$0xff]
      %v1899 = vld [vmem:[%s1883 + $0x78] sm:$0xff]
      %v1900 = vld [vmem:[%s1883 + $0x80] sm:$0xff]
      %v1901 = vld [vmem:[%s1883 + $0x88] sm:$0xff]
      %v1902 = vld [vmem:[%s1883 + $0x90] sm:$0xff]
      %v1903 = vld [vmem:[%s1883 + $0x98] sm:$0xff]
      %v1904 = vld [vmem:[%s1883 + $0xa0] sm:$0xff]
      %v1905 = vld [vmem:[%s1883 + $0xa8] sm:$0xff]
      %v1906 = vld [vmem:[%s1883 + $0xb0] sm:$0xff]
      %v1907 = vld [vmem:[%s1883 + $0xb8] sm:$0xff]
      %v1908 = vld [vmem:[%s1883 + $0xc0] sm:$0xff]
      %v1909 = vld [vmem:[%s1883 + $0xc8] sm:$0xff]
      %v1910 = vld [vmem:[%s1883 + $0xd0] sm:$0xff]
      %v1911 = vld [vmem:[%s1883 + $0xd8] sm:$0xff]
      %v1912 = vld [vmem:[%s1883 + $0xe0] sm:$0xff]
      %v1913 = vld [vmem:[%s1883 + $0xe8] sm:$0xff]
      %v1914 = vld [vmem:[%s1883 + $0xf0] sm:$0xff]
      %v1915 = vld [vmem:[%s1883 + $0xf8] sm:$0xff]
      %v1948 = vunpack.c.l.b16 %v1884
      %v1949 = vunpack.c.h.b16 %v1884
      %v1950 = vunpack.c.l.b16 %v1885
      %v1951 = vunpack.c.h.b16 %v1885
      %v1952 = vunpack.c.l.b16 %v1886
      %v1953 = vunpack.c.h.b16 %v1886
      %v1954 = vunpack.c.l.b16 %v1887
      %v1955 = vunpack.c.h.b16 %v1887
      %v1956 = vunpack.c.l.b16 %v1888
      %v1957 = vunpack.c.h.b16 %v1888
      %v1958 = vunpack.c.l.b16 %v1889
      %v1959 = vunpack.c.h.b16 %v1889
      %v1960 = vunpack.c.l.b16 %v1890
      %v1961 = vunpack.c.h.b16 %v1890
      %v1962 = vunpack.c.l.b16 %v1891
      %v1963 = vunpack.c.h.b16 %v1891
      %v1964 = vunpack.c.l.b16 %v1892
      %v1965 = vunpack.c.h.b16 %v1892
      %v1966 = vunpack.c.l.b16 %v1893
      %v1967 = vunpack.c.h.b16 %v1893
      %v1968 = vunpack.c.l.b16 %v1894
      %v1969 = vunpack.c.h.b16 %v1894
      %v1970 = vunpack.c.l.b16 %v1895
      %v1971 = vunpack.c.h.b16 %v1895
      %v1972 = vunpack.c.l.b16 %v1896
      %v1973 = vunpack.c.h.b16 %v1896
      %v1974 = vunpack.c.l.b16 %v1897
      %v1975 = vunpack.c.h.b16 %v1897
      %v1976 = vunpack.c.l.b16 %v1898
      %v1977 = vunpack.c.h.b16 %v1898
      %v1978 = vunpack.c.l.b16 %v1899
      %v1979 = vunpack.c.h.b16 %v1899
      %v1980 = vunpack.c.l.b16 %v1900
      %v1981 = vunpack.c.h.b16 %v1900
      %v1982 = vunpack.c.l.b16 %v1901
      %v1983 = vunpack.c.h.b16 %v1901
      %v1984 = vunpack.c.l.b16 %v1902
      %v1985 = vunpack.c.h.b16 %v1902
      %v1986 = vunpack.c.l.b16 %v1903
      %v1987 = vunpack.c.h.b16 %v1903
      %v1988 = vunpack.c.l.b16 %v1904
      %v1989 = vunpack.c.h.b16 %v1904
      %v1990 = vunpack.c.l.b16 %v1905
      %v1991 = vunpack.c.h.b16 %v1905
      %v1992 = vunpack.c.l.b16 %v1906
      %v1993 = vunpack.c.h.b16 %v1906
      %v1994 = vunpack.c.l.b16 %v1907
      %v1995 = vunpack.c.h.b16 %v1907
      %v1996 = vunpack.c.l.b16 %v1908
      %v1997 = vunpack.c.h.b16 %v1908
      %v1998 = vunpack.c.l.b16 %v1909
      %v1999 = vunpack.c.h.b16 %v1909
      %v2000 = vunpack.c.l.b16 %v1910
      %v2001 = vunpack.c.h.b16 %v1910
      %v2002 = vunpack.c.l.b16 %v1911
      %v2003 = vunpack.c.h.b16 %v1911
      %v2004 = vunpack.c.l.b16 %v1912
      %v2005 = vunpack.c.h.b16 %v1912
      %v2006 = vunpack.c.l.b16 %v1913
      %v2007 = vunpack.c.h.b16 %v1913
      %v2008 = vunpack.c.l.b16 %v1914
      %v2009 = vunpack.c.h.b16 %v1914
      %v2010 = vunpack.c.l.b16 %v1915
      %v2011 = vunpack.c.h.b16 %v1915
      %v2012 = vpack.c.b16 %v1950, %v1948
      %v2013 = vpack.c.b16 %v1951, %v1949
      %v2014 = vpack.c.b16 %v1954, %v1952
      %v2015 = vpack.c.b16 %v1955, %v1953
      %v2016 = vpack.c.b16 %v1958, %v1956
      %v2017 = vpack.c.b16 %v1959, %v1957
      %v2018 = vpack.c.b16 %v1962, %v1960
      %v2019 = vpack.c.b16 %v1963, %v1961
      %v2020 = vpack.c.b16 %v1966, %v1964
      %v2021 = vpack.c.b16 %v1967, %v1965
      %v2022 = vpack.c.b16 %v1970, %v1968
      %v2023 = vpack.c.b16 %v1971, %v1969
      %v2024 = vpack.c.b16 %v1974, %v1972
      %v2025 = vpack.c.b16 %v1975, %v1973
      %v2026 = vpack.c.b16 %v1978, %v1976
      %v2027 = vpack.c.b16 %v1979, %v1977
      %v2028 = vpack.c.b16 %v1982, %v1980
      %v2029 = vpack.c.b16 %v1983, %v1981
      %v2030 = vpack.c.b16 %v1986, %v1984
      %v2031 = vpack.c.b16 %v1987, %v1985
      %v2032 = vpack.c.b16 %v1990, %v1988
      %v2033 = vpack.c.b16 %v1991, %v1989
      %v2034 = vpack.c.b16 %v1994, %v1992
      %v2035 = vpack.c.b16 %v1995, %v1993
      %v2036 = vpack.c.b16 %v1998, %v1996
      %v2037 = vpack.c.b16 %v1999, %v1997
      %v2038 = vpack.c.b16 %v2002, %v2000
      %v2039 = vpack.c.b16 %v2003, %v2001
      %v2040 = vpack.c.b16 %v2006, %v2004
      %v2041 = vpack.c.b16 %v2007, %v2005
      %v2042 = vpack.c.b16 %v2010, %v2008
      %v2043 = vpack.c.b16 %v2011, %v2009
      %2076 = vmatpush.bf16.msra.mxu0 %v2026
      %2077 = vmatpush.bf16.msra.mxu0 %v2024
      %2078 = vmatpush.bf16.msra.mxu0 %v2022
      %2079 = vmatpush.bf16.msra.mxu0 %v2020
      %2080 = vmatpush.bf16.msra.mxu0 %v2018
      %2081 = vmatpush.bf16.msra.mxu0 %v2016
      %2082 = vmatpush.bf16.msra.mxu0 %v2014
      %2083 = vmatpush.bf16.msra.mxu0 %v2012
      %2084 = vmatmul.bf16.gmra.mxu0 %v1107
      %v2085 = vpop.f32.mrf.mxu0
      %v2086 = vadd.f32 0.0, %v2085
      %v2087 = vpop.f32.mrf.mxu0
      %v2088 = vadd.f32 0.0, %v2087
      %2089 = vmatmul.bf16.gmra.mxu0 %v1109
      %v2090 = vpop.f32.mrf.mxu0
      %v2091 = vadd.f32 0.0, %v2090
      %v2092 = vpop.f32.mrf.mxu0
      %v2093 = vadd.f32 0.0, %v2092
      %2094 = vdwg.mxu0
      %2095 = vmatpush.bf16.msra.mxu0 %v2042
      %2096 = vmatpush.bf16.msra.mxu0 %v2040
      %2097 = vmatpush.bf16.msra.mxu0 %v2038
      %2098 = vmatpush.bf16.msra.mxu0 %v2036
      %2099 = vmatpush.bf16.msra.mxu0 %v2034
      %2100 = vmatpush.bf16.msra.mxu0 %v2032
      %2101 = vmatpush.bf16.msra.mxu0 %v2030
      %2102 = vmatpush.bf16.msra.mxu0 %v2028
      %2103 = vmatmul.bf16.gmra.mxu0 %v1108
      %v2104 = vpop.f32.mrf.mxu0
      %v2105 = vadd.f32 %v2086, %v2104
      %v2106 = vpop.f32.mrf.mxu0
      %v2107 = vadd.f32 %v2088, %v2106
      %2108 = vmatmul.bf16.gmra.mxu0 %v1110
      %v2109 = vpop.f32.mrf.mxu0
      %v2110 = vadd.f32 %v2091, %v2109
      %v2111 = vpop.f32.mrf.mxu0
      %v2112 = vadd.f32 %v2093, %v2111
      %2113 = vdwg.mxu0
      %2114 = vmatpush.bf16.msra.mxu0 %v2027
      %2115 = vmatpush.bf16.msra.mxu0 %v2025
      %2116 = vmatpush.bf16.msra.mxu0 %v2023
      %2117 = vmatpush.bf16.msra.mxu0 %v2021
      %2118 = vmatpush.bf16.msra.mxu0 %v2019
      %2119 = vmatpush.bf16.msra.mxu0 %v2017
      %2120 = vmatpush.bf16.msra.mxu0 %v2015
      %2121 = vmatpush.bf16.msra.mxu0 %v2013
      %2122 = vmatmul.bf16.gmra.mxu0 %v1107
      %v2123 = vpop.f32.mrf.mxu0
      %v2124 = vadd.f32 0.0, %v2123
      %v2125 = vpop.f32.mrf.mxu0
      %v2126 = vadd.f32 0.0, %v2125
      %2127 = vmatmul.bf16.gmra.mxu0 %v1109
      %v2128 = vpop.f32.mrf.mxu0
      %v2129 = vadd.f32 0.0, %v2128
      %v2130 = vpop.f32.mrf.mxu0
      %v2131 = vadd.f32 0.0, %v2130
      %2132 = vdwg.mxu0
      %2133 = vmatpush.bf16.msra.mxu0 %v2043
      %2134 = vmatpush.bf16.msra.mxu0 %v2041
      %2135 = vmatpush.bf16.msra.mxu0 %v2039
      %2136 = vmatpush.bf16.msra.mxu0 %v2037
      %2137 = vmatpush.bf16.msra.mxu0 %v2035
      %2138 = vmatpush.bf16.msra.mxu0 %v2033
      %2139 = vmatpush.bf16.msra.mxu0 %v2031
      %2140 = vmatpush.bf16.msra.mxu0 %v2029
      %2141 = vmatmul.bf16.gmra.mxu0 %v1108
      %v2142 = vpop.f32.mrf.mxu0
      %v2143 = vadd.f32 %v2124, %v2142
      %v2144 = vpop.f32.mrf.mxu0
      %v2145 = vadd.f32 %v2126, %v2144
      %2146 = vmatmul.bf16.gmra.mxu0 %v1110
      %v2147 = vpop.f32.mrf.mxu0
      %v2148 = vadd.f32 %v2129, %v2147
      %v2149 = vpop.f32.mrf.mxu0
      %v2150 = vadd.f32 %v2131, %v2149
      %2151 = vdwg.mxu0
      %s2152 = scalar_lea.vmem %s4, 128
      %v2153 = vld [vmem:[%s2152] sm:$0xff]
      %v2154 = vld [vmem:[%s2152 + $0x8] sm:$0xff]
      %v2155 = vld [vmem:[%s2152 + $0x10] sm:$0xff]
      %v2156 = vld [vmem:[%s2152 + $0x18] sm:$0xff]
      %v2157 = vld [vmem:[%s2152 + $0x20] sm:$0xff]
      %v2158 = vld [vmem:[%s2152 + $0x28] sm:$0xff]
      %v2159 = vld [vmem:[%s2152 + $0x30] sm:$0xff]
      %v2160 = vld [vmem:[%s2152 + $0x38] sm:$0xff]
      %v2162 = vsel %vm1670, %v2153, 0
      %v2165 = vsel %vm1670, %v2154, 0
      %v2168 = vsel %vm1670, %v2155, 0
      %v2171 = vsel %vm1670, %v2156, 0
      %v2174 = vsel %vm1670, %v2157, 0
      %v2177 = vsel %vm1670, %v2158, 0
      %v2180 = vsel %vm1670, %v2159, 0
      %v2183 = vsel %vm1670, %v2160, 0
      %2185 = vmatpush.msra.mxu0 0.0
      %2186 = vmatpush.msra.mxu0 0.0
      %2187 = vmatpush.msra.mxu0 0.0
      %2188 = vmatpush.msra.mxu0 0.0
      %2189 = vmatpush.msra.mxu0 0.0
      %2190 = vmatpush.msra.mxu0 0.0
      %2191 = vmatpush.msra.mxu0 0.0
      %2192 = vmatpush.msra.mxu0 0.0
      %2193 = vmatpush.msra.mxu0 0.0
      %2194 = vmatpush.msra.mxu0 0.0
      %2195 = vmatpush.msra.mxu0 0.0
      %2196 = vmatpush.msra.mxu0 0.0
      %2197 = vmatpush.msra.mxu0 %v2112
      %2198 = vmatpush.msra.mxu0 %v2110
      %2199 = vmatpush.msra.mxu0 %v2107
      %2200 = vmatpush.msra.mxu0 %v2105
      %2201 = vmatmul.f32.gmra.mxu0 %v2162
      %v2202 = vpop.f32.mrf.mxu0
      %v2203 = vadd.f32 0.0, %v2202
      %2204 = vmatmul.f32.gmra.mxu0 %v2165
      %v2205 = vpop.f32.mrf.mxu0
      %v2206 = vadd.f32 0.0, %v2205
      %2207 = vmatmul.f32.gmra.mxu0 %v2168
      %v2208 = vpop.f32.mrf.mxu0
      %v2209 = vadd.f32 0.0, %v2208
      %2210 = vmatmul.f32.gmra.mxu0 %v2171
      %v2211 = vpop.f32.mrf.mxu0
      %v2212 = vadd.f32 0.0, %v2211
      %2213 = vmatmul.f32.gmra.mxu0 %v2174
      %v2214 = vpop.f32.mrf.mxu0
      %v2215 = vadd.f32 0.0, %v2214
      %2216 = vmatmul.f32.gmra.mxu0 %v2177
      %v2217 = vpop.f32.mrf.mxu0
      %v2218 = vadd.f32 0.0, %v2217
      %2219 = vmatmul.f32.gmra.mxu0 %v2180
      %v2220 = vpop.f32.mrf.mxu0
      %v2221 = vadd.f32 0.0, %v2220
      %2222 = vmatmul.f32.gmra.mxu0 %v2183
      %v2223 = vpop.f32.mrf.mxu0
      %v2224 = vadd.f32 0.0, %v2223
      %2225 = vdwg.mxu0
      %2226 = vmatpush.msra.mxu0 0.0
      %2227 = vmatpush.msra.mxu0 0.0
      %2228 = vmatpush.msra.mxu0 0.0
      %2229 = vmatpush.msra.mxu0 0.0
      %2230 = vmatpush.msra.mxu0 0.0
      %2231 = vmatpush.msra.mxu0 0.0
      %2232 = vmatpush.msra.mxu0 0.0
      %2233 = vmatpush.msra.mxu0 0.0
      %2234 = vmatpush.msra.mxu0 0.0
      %2235 = vmatpush.msra.mxu0 0.0
      %2236 = vmatpush.msra.mxu0 0.0
      %2237 = vmatpush.msra.mxu0 0.0
      %2238 = vmatpush.msra.mxu0 %v2150
      %2239 = vmatpush.msra.mxu0 %v2148
      %2240 = vmatpush.msra.mxu0 %v2145
      %2241 = vmatpush.msra.mxu0 %v2143
      %2242 = vmatmul.f32.gmra.mxu0 %v2162
      %v2243 = vpop.f32.mrf.mxu0
      %v2244 = vadd.f32 0.0, %v2243
      %2245 = vmatmul.f32.gmra.mxu0 %v2165
      %v2246 = vpop.f32.mrf.mxu0
      %v2247 = vadd.f32 0.0, %v2246
      %2248 = vmatmul.f32.gmra.mxu0 %v2168
      %v2249 = vpop.f32.mrf.mxu0
      %v2250 = vadd.f32 0.0, %v2249
      %2251 = vmatmul.f32.gmra.mxu0 %v2171
      %v2252 = vpop.f32.mrf.mxu0
      %v2253 = vadd.f32 0.0, %v2252
      %2254 = vmatmul.f32.gmra.mxu0 %v2174
      %v2255 = vpop.f32.mrf.mxu0
      %v2256 = vadd.f32 0.0, %v2255
      %2257 = vmatmul.f32.gmra.mxu0 %v2177
      %v2258 = vpop.f32.mrf.mxu0
      %v2259 = vadd.f32 0.0, %v2258
      %2260 = vmatmul.f32.gmra.mxu0 %v2180
      %v2261 = vpop.f32.mrf.mxu0
      %v2262 = vadd.f32 0.0, %v2261
      %2263 = vmatmul.f32.gmra.mxu0 %v2183
      %v2264 = vpop.f32.mrf.mxu0
      %v2265 = vadd.f32 0.0, %v2264
      %2266 = vdwg.mxu0
      %v2267 = vadd.f32 %v1819, %v2203
      %v2268 = vadd.f32 %v1860, %v2244
      %v2269 = vadd.f32 %v1822, %v2206
      %v2270 = vadd.f32 %v1863, %v2247
      %v2271 = vadd.f32 %v1825, %v2209
      %v2272 = vadd.f32 %v1866, %v2250
      %v2273 = vadd.f32 %v1828, %v2212
      %v2274 = vadd.f32 %v1869, %v2253
      %v2275 = vadd.f32 %v1831, %v2215
      %v2276 = vadd.f32 %v1872, %v2256
      %v2277 = vadd.f32 %v1834, %v2218
      %v2278 = vadd.f32 %v1875, %v2259
      %v2279 = vadd.f32 %v1837, %v2221
      %v2280 = vadd.f32 %v1878, %v2262
      %v2281 = vadd.f32 %v1840, %v2224
      %v2282 = vadd.f32 %v1881, %v2265
      %v2283 = vld [vmem:[%s6] sm:$0x3]
      %v2285 = vperm.slane %v2283, 0
      %v2286 = vperm.slane %v2283, 1
      %v2289 = vadd.f32 %v2267, %v2285
      %v2290 = vadd.f32 %v2268, %v2286
      %v2291 = vadd.f32 %v2269, %v2285
      %v2292 = vadd.f32 %v2270, %v2286
      %v2293 = vadd.f32 %v2271, %v2285
      %v2294 = vadd.f32 %v2272, %v2286
      %v2295 = vadd.f32 %v2273, %v2285
      %v2296 = vadd.f32 %v2274, %v2286
      %v2297 = vadd.f32 %v2275, %v2285
      %v2298 = vadd.f32 %v2276, %v2286
      %v2299 = vadd.f32 %v2277, %v2285
      %v2300 = vadd.f32 %v2278, %v2286
      %v2301 = vadd.f32 %v2279, %v2285
      %v2302 = vadd.f32 %v2280, %v2286
      %v2303 = vadd.f32 %v2281, %v2285
      %v2304 = vadd.f32 %v2282, %v2286
      %v2305 = vmul.f32 %v2289, 0.5
      %v2306 = vmul.f32 %v2290, 0.5
      %v2307 = vmul.f32 %v2291, 0.5
      %v2308 = vmul.f32 %v2292, 0.5
      %v2309 = vmul.f32 %v2293, 0.5
      %v2310 = vmul.f32 %v2294, 0.5
      %v2311 = vmul.f32 %v2295, 0.5
      %v2312 = vmul.f32 %v2296, 0.5
      %v2313 = vmul.f32 %v2297, 0.5
      %v2314 = vmul.f32 %v2298, 0.5
      %v2315 = vmul.f32 %v2299, 0.5
      %v2316 = vmul.f32 %v2300, 0.5
      %v2317 = vmul.f32 %v2301, 0.5
      %v2318 = vmul.f32 %v2302, 0.5
      %v2319 = vmul.f32 %v2303, 0.5
      %v2320 = vmul.f32 %v2304, 0.5
      %v2321 = vmul.f32 %v2289, 0.70710677
      %v2322 = vmul.f32 %v2290, 0.70710677
      %v2323 = vmul.f32 %v2291, 0.70710677
      %v2324 = vmul.f32 %v2292, 0.70710677
      %v2325 = vmul.f32 %v2293, 0.70710677
      %v2326 = vmul.f32 %v2294, 0.70710677
      %v2327 = vmul.f32 %v2295, 0.70710677
      %v2328 = vmul.f32 %v2296, 0.70710677
      %v2329 = vmul.f32 %v2297, 0.70710677
      %v2330 = vmul.f32 %v2298, 0.70710677
      %v2331 = vmul.f32 %v2299, 0.70710677
      %v2332 = vmul.f32 %v2300, 0.70710677
      %v2333 = vmul.f32 %v2301, 0.70710677
      %v2334 = vmul.f32 %v2302, 0.70710677
      %v2335 = vmul.f32 %v2303, 0.70710677
      %v2336 = vmul.f32 %v2304, 0.70710677
      %v2337 = vmul.f32 %v2321, %v2321
      %v2338 = vmin.f32 16.0, %v2337
      %v2339 = vmul.f32 %v2338, 2.1237322e-06
      %v2340 = vadd.f32 %v2339, 0.00028619796
      %v2341 = vmul.f32 %v2338, %v2340
      %v2342 = vadd.f32 %v2341, 0.0036580483
      %v2343 = vmul.f32 %v2338, %v2342
      %v2344 = vadd.f32 %v2343, 0.05243302
      %v2345 = vmul.f32 %v2338, %v2344
      %v2346 = vadd.f32 %v2345, 0.18741608
      %v2347 = vmul.f32 %v2338, %v2346
      %v2348 = vadd.f32 %v2347, 1.1283791
      %v2349 = vmul.f32 %v2321, %v2348
      %v2350 = vmul.f32 %v2338, 3.8918573e-05
      %v2351 = vadd.f32 %v2350, 0.001143296
      %v2352 = vmul.f32 %v2338, %v2351
      %v2353 = vadd.f32 %v2352, 0.014752088
      %v2354 = vmul.f32 %v2338, %v2353
      %v2355 = vadd.f32 %v2354, 0.112945676
      %v2356 = vmul.f32 %v2338, %v2355
      %v2357 = vadd.f32 %v2356, 0.4994258
      %v2358 = vmul.f32 %v2338, %v2357
      %v2359 = vadd.f32 %v2358, 1.0
      %v2360 = vrcp.pop %v2359
      %v2361 = vmul.f32 %v2359, %v2360
      %v2362 = vsub.f32 1.0, %v2361
      %v2363 = vmul.f32 %v2360, %v2362
      %v2364 = vadd.f32 %v2360, %v2363
      %vm2365 = vweird.f32 %v2359
      %vm2366 = vweird.f32 %v2360
      %vm2367 = vmor %vm2365, %vm2366
      %v2368 = vsel %vm2367, %v2360, %v2364
      %v2369 = vand.u32 2147483647, %v2359
      %vm2370 = vcmp.eq.f32.partialorder %v2369, 8.507059e+37
      %v2371 = vand.u32 %v2359, 2147483648
      %v2372 = vor.u32 1.1754944e-38, %v2371
      %v2373 = vsel %vm2370, %v2372, %v2368
      %v2374 = vmul.f32 %v2349, %v2373
      %v2375 = vmin.f32 %v2374, 1.0
      %v2376 = vmax.f32 %v2375, -1.0
      %v2377 = vmul.f32 %v2322, %v2322
      %v2378 = vmin.f32 16.0, %v2377
      %v2379 = vmul.f32 %v2378, 2.1237322e-06
      %v2380 = vadd.f32 %v2379, 0.00028619796
      %v2381 = vmul.f32 %v2378, %v2380
      %v2382 = vadd.f32 %v2381, 0.0036580483
      %v2383 = vmul.f32 %v2378, %v2382
      %v2384 = vadd.f32 %v2383, 0.05243302
      %v2385 = vmul.f32 %v2378, %v2384
      %v2386 = vadd.f32 %v2385, 0.18741608
      %v2387 = vmul.f32 %v2378, %v2386
      %v2388 = vadd.f32 %v2387, 1.1283791
      %v2389 = vmul.f32 %v2322, %v2388
      %v2390 = vmul.f32 %v2378, 3.8918573e-05
      %v2391 = vadd.f32 %v2390, 0.001143296
      %v2392 = vmul.f32 %v2378, %v2391
      %v2393 = vadd.f32 %v2392, 0.014752088
      %v2394 = vmul.f32 %v2378, %v2393
      %v2395 = vadd.f32 %v2394, 0.112945676
      %v2396 = vmul.f32 %v2378, %v2395
      %v2397 = vadd.f32 %v2396, 0.4994258
      %v2398 = vmul.f32 %v2378, %v2397
      %v2399 = vadd.f32 %v2398, 1.0
      %v2400 = vrcp.pop %v2399
      %v2401 = vmul.f32 %v2399, %v2400
      %v2402 = vsub.f32 1.0, %v2401
      %v2403 = vmul.f32 %v2400, %v2402
      %v2404 = vadd.f32 %v2400, %v2403
      %vm2405 = vweird.f32 %v2399
      %vm2406 = vweird.f32 %v2400
      %vm2407 = vmor %vm2405, %vm2406
      %v2408 = vsel %vm2407, %v2400, %v2404
      %v2409 = vand.u32 2147483647, %v2399
      %vm2410 = vcmp.eq.f32.partialorder %v2409, 8.507059e+37
      %v2411 = vand.u32 %v2399, 2147483648
      %v2412 = vor.u32 1.1754944e-38, %v2411
      %v2413 = vsel %vm2410, %v2412, %v2408
      %v2414 = vmul.f32 %v2389, %v2413
      %v2415 = vmin.f32 %v2414, 1.0
      %v2416 = vmax.f32 %v2415, -1.0
      %v2417 = vmul.f32 %v2323, %v2323
      %v2418 = vmin.f32 16.0, %v2417
      %v2419 = vmul.f32 %v2418, 2.1237322e-06
      %v2420 = vadd.f32 %v2419, 0.00028619796
      %v2421 = vmul.f32 %v2418, %v2420
      %v2422 = vadd.f32 %v2421, 0.0036580483
      %v2423 = vmul.f32 %v2418, %v2422
      %v2424 = vadd.f32 %v2423, 0.05243302
      %v2425 = vmul.f32 %v2418, %v2424
      %v2426 = vadd.f32 %v2425, 0.18741608
      %v2427 = vmul.f32 %v2418, %v2426
      %v2428 = vadd.f32 %v2427, 1.1283791
      %v2429 = vmul.f32 %v2323, %v2428
      %v2430 = vmul.f32 %v2418, 3.8918573e-05
      %v2431 = vadd.f32 %v2430, 0.001143296
      %v2432 = vmul.f32 %v2418, %v2431
      %v2433 = vadd.f32 %v2432, 0.014752088
      %v2434 = vmul.f32 %v2418, %v2433
      %v2435 = vadd.f32 %v2434, 0.112945676
      %v2436 = vmul.f32 %v2418, %v2435
      %v2437 = vadd.f32 %v2436, 0.4994258
      %v2438 = vmul.f32 %v2418, %v2437
      %v2439 = vadd.f32 %v2438, 1.0
      %v2440 = vrcp.pop %v2439
      %v2441 = vmul.f32 %v2439, %v2440
      %v2442 = vsub.f32 1.0, %v2441
      %v2443 = vmul.f32 %v2440, %v2442
      %v2444 = vadd.f32 %v2440, %v2443
      %vm2445 = vweird.f32 %v2439
      %vm2446 = vweird.f32 %v2440
      %vm2447 = vmor %vm2445, %vm2446
      %v2448 = vsel %vm2447, %v2440, %v2444
      %v2449 = vand.u32 2147483647, %v2439
      %vm2450 = vcmp.eq.f32.partialorder %v2449, 8.507059e+37
      %v2451 = vand.u32 %v2439, 2147483648
      %v2452 = vor.u32 1.1754944e-38, %v2451
      %v2453 = vsel %vm2450, %v2452, %v2448
      %v2454 = vmul.f32 %v2429, %v2453
      %v2455 = vmin.f32 %v2454, 1.0
      %v2456 = vmax.f32 %v2455, -1.0
      %v2457 = vmul.f32 %v2324, %v2324
      %v2458 = vmin.f32 16.0, %v2457
      %v2459 = vmul.f32 %v2458, 2.1237322e-06
      %v2460 = vadd.f32 %v2459, 0.00028619796
      %v2461 = vmul.f32 %v2458, %v2460
      %v2462 = vadd.f32 %v2461, 0.0036580483
      %v2463 = vmul.f32 %v2458, %v2462
      %v2464 = vadd.f32 %v2463, 0.05243302
      %v2465 = vmul.f32 %v2458, %v2464
      %v2466 = vadd.f32 %v2465, 0.18741608
      %v2467 = vmul.f32 %v2458, %v2466
      %v2468 = vadd.f32 %v2467, 1.1283791
      %v2469 = vmul.f32 %v2324, %v2468
      %v2470 = vmul.f32 %v2458, 3.8918573e-05
      %v2471 = vadd.f32 %v2470, 0.001143296
      %v2472 = vmul.f32 %v2458, %v2471
      %v2473 = vadd.f32 %v2472, 0.014752088
      %v2474 = vmul.f32 %v2458, %v2473
      %v2475 = vadd.f32 %v2474, 0.112945676
      %v2476 = vmul.f32 %v2458, %v2475
      %v2477 = vadd.f32 %v2476, 0.4994258
      %v2478 = vmul.f32 %v2458, %v2477
      %v2479 = vadd.f32 %v2478, 1.0
      %v2480 = vrcp.pop %v2479
      %v2481 = vmul.f32 %v2479, %v2480
      %v2482 = vsub.f32 1.0, %v2481
      %v2483 = vmul.f32 %v2480, %v2482
      %v2484 = vadd.f32 %v2480, %v2483
      %vm2485 = vweird.f32 %v2479
      %vm2486 = vweird.f32 %v2480
      %vm2487 = vmor %vm2485, %vm2486
      %v2488 = vsel %vm2487, %v2480, %v2484
      %v2489 = vand.u32 2147483647, %v2479
      %vm2490 = vcmp.eq.f32.partialorder %v2489, 8.507059e+37
      %v2491 = vand.u32 %v2479, 2147483648
      %v2492 = vor.u32 1.1754944e-38, %v2491
      %v2493 = vsel %vm2490, %v2492, %v2488
      %v2494 = vmul.f32 %v2469, %v2493
      %v2495 = vmin.f32 %v2494, 1.0
      %v2496 = vmax.f32 %v2495, -1.0
      %v2497 = vmul.f32 %v2325, %v2325
      %v2498 = vmin.f32 16.0, %v2497
      %v2499 = vmul.f32 %v2498, 2.1237322e-06
      %v2500 = vadd.f32 %v2499, 0.00028619796
      %v2501 = vmul.f32 %v2498, %v2500
      %v2502 = vadd.f32 %v2501, 0.0036580483
      %v2503 = vmul.f32 %v2498, %v2502
      %v2504 = vadd.f32 %v2503, 0.05243302
      %v2505 = vmul.f32 %v2498, %v2504
      %v2506 = vadd.f32 %v2505, 0.18741608
      %v2507 = vmul.f32 %v2498, %v2506
      %v2508 = vadd.f32 %v2507, 1.1283791
      %v2509 = vmul.f32 %v2325, %v2508
      %v2510 = vmul.f32 %v2498, 3.8918573e-05
      %v2511 = vadd.f32 %v2510, 0.001143296
      %v2512 = vmul.f32 %v2498, %v2511
      %v2513 = vadd.f32 %v2512, 0.014752088
      %v2514 = vmul.f32 %v2498, %v2513
      %v2515 = vadd.f32 %v2514, 0.112945676
      %v2516 = vmul.f32 %v2498, %v2515
      %v2517 = vadd.f32 %v2516, 0.4994258
      %v2518 = vmul.f32 %v2498, %v2517
      %v2519 = vadd.f32 %v2518, 1.0
      %v2520 = vrcp.pop %v2519
      %v2521 = vmul.f32 %v2519, %v2520
      %v2522 = vsub.f32 1.0, %v2521
      %v2523 = vmul.f32 %v2520, %v2522
      %v2524 = vadd.f32 %v2520, %v2523
      %vm2525 = vweird.f32 %v2519
      %vm2526 = vweird.f32 %v2520
      %vm2527 = vmor %vm2525, %vm2526
      %v2528 = vsel %vm2527, %v2520, %v2524
      %v2529 = vand.u32 2147483647, %v2519
      %vm2530 = vcmp.eq.f32.partialorder %v2529, 8.507059e+37
      %v2531 = vand.u32 %v2519, 2147483648
      %v2532 = vor.u32 1.1754944e-38, %v2531
      %v2533 = vsel %vm2530, %v2532, %v2528
      %v2534 = vmul.f32 %v2509, %v2533
      %v2535 = vmin.f32 %v2534, 1.0
      %v2536 = vmax.f32 %v2535, -1.0
      %v2537 = vmul.f32 %v2326, %v2326
      %v2538 = vmin.f32 16.0, %v2537
      %v2539 = vmul.f32 %v2538, 2.1237322e-06
      %v2540 = vadd.f32 %v2539, 0.00028619796
      %v2541 = vmul.f32 %v2538, %v2540
      %v2542 = vadd.f32 %v2541, 0.0036580483
      %v2543 = vmul.f32 %v2538, %v2542
      %v2544 = vadd.f32 %v2543, 0.05243302
      %v2545 = vmul.f32 %v2538, %v2544
      %v2546 = vadd.f32 %v2545, 0.18741608
      %v2547 = vmul.f32 %v2538, %v2546
      %v2548 = vadd.f32 %v2547, 1.1283791
      %v2549 = vmul.f32 %v2326, %v2548
      %v2550 = vmul.f32 %v2538, 3.8918573e-05
      %v2551 = vadd.f32 %v2550, 0.001143296
      %v2552 = vmul.f32 %v2538, %v2551
      %v2553 = vadd.f32 %v2552, 0.014752088
      %v2554 = vmul.f32 %v2538, %v2553
      %v2555 = vadd.f32 %v2554, 0.112945676
      %v2556 = vmul.f32 %v2538, %v2555
      %v2557 = vadd.f32 %v2556, 0.4994258
      %v2558 = vmul.f32 %v2538, %v2557
      %v2559 = vadd.f32 %v2558, 1.0
      %v2560 = vrcp.pop %v2559
      %v2561 = vmul.f32 %v2559, %v2560
      %v2562 = vsub.f32 1.0, %v2561
      %v2563 = vmul.f32 %v2560, %v2562
      %v2564 = vadd.f32 %v2560, %v2563
      %vm2565 = vweird.f32 %v2559
      %vm2566 = vweird.f32 %v2560
      %vm2567 = vmor %vm2565, %vm2566
      %v2568 = vsel %vm2567, %v2560, %v2564
      %v2569 = vand.u32 2147483647, %v2559
      %vm2570 = vcmp.eq.f32.partialorder %v2569, 8.507059e+37
      %v2571 = vand.u32 %v2559, 2147483648
      %v2572 = vor.u32 1.1754944e-38, %v2571
      %v2573 = vsel %vm2570, %v2572, %v2568
      %v2574 = vmul.f32 %v2549, %v2573
      %v2575 = vmin.f32 %v2574, 1.0
      %v2576 = vmax.f32 %v2575, -1.0
      %v2577 = vmul.f32 %v2327, %v2327
      %v2578 = vmin.f32 16.0, %v2577
      %v2579 = vmul.f32 %v2578, 2.1237322e-06
      %v2580 = vadd.f32 %v2579, 0.00028619796
      %v2581 = vmul.f32 %v2578, %v2580
      %v2582 = vadd.f32 %v2581, 0.0036580483
      %v2583 = vmul.f32 %v2578, %v2582
      %v2584 = vadd.f32 %v2583, 0.05243302
      %v2585 = vmul.f32 %v2578, %v2584
      %v2586 = vadd.f32 %v2585, 0.18741608
      %v2587 = vmul.f32 %v2578, %v2586
      %v2588 = vadd.f32 %v2587, 1.1283791
      %v2589 = vmul.f32 %v2327, %v2588
      %v2590 = vmul.f32 %v2578, 3.8918573e-05
      %v2591 = vadd.f32 %v2590, 0.001143296
      %v2592 = vmul.f32 %v2578, %v2591
      %v2593 = vadd.f32 %v2592, 0.014752088
      %v2594 = vmul.f32 %v2578, %v2593
      %v2595 = vadd.f32 %v2594, 0.112945676
      %v2596 = vmul.f32 %v2578, %v2595
      %v2597 = vadd.f32 %v2596, 0.4994258
      %v2598 = vmul.f32 %v2578, %v2597
      %v2599 = vadd.f32 %v2598, 1.0
      %v2600 = vrcp.pop %v2599
      %v2601 = vmul.f32 %v2599, %v2600
      %v2602 = vsub.f32 1.0, %v2601
      %v2603 = vmul.f32 %v2600, %v2602
      %v2604 = vadd.f32 %v2600, %v2603
      %vm2605 = vweird.f32 %v2599
      %vm2606 = vweird.f32 %v2600
      %vm2607 = vmor %vm2605, %vm2606
      %v2608 = vsel %vm2607, %v2600, %v2604
      %v2609 = vand.u32 2147483647, %v2599
      %vm2610 = vcmp.eq.f32.partialorder %v2609, 8.507059e+37
      %v2611 = vand.u32 %v2599, 2147483648
      %v2612 = vor.u32 1.1754944e-38, %v2611
      %v2613 = vsel %vm2610, %v2612, %v2608
      %v2614 = vmul.f32 %v2589, %v2613
      %v2615 = vmin.f32 %v2614, 1.0
      %v2616 = vmax.f32 %v2615, -1.0
      %v2617 = vmul.f32 %v2328, %v2328
      %v2618 = vmin.f32 16.0, %v2617
      %v2619 = vmul.f32 %v2618, 2.1237322e-06
      %v2620 = vadd.f32 %v2619, 0.00028619796
      %v2621 = vmul.f32 %v2618, %v2620
      %v2622 = vadd.f32 %v2621, 0.0036580483
      %v2623 = vmul.f32 %v2618, %v2622
      %v2624 = vadd.f32 %v2623, 0.05243302
      %v2625 = vmul.f32 %v2618, %v2624
      %v2626 = vadd.f32 %v2625, 0.18741608
      %v2627 = vmul.f32 %v2618, %v2626
      %v2628 = vadd.f32 %v2627, 1.1283791
      %v2629 = vmul.f32 %v2328, %v2628
      %v2630 = vmul.f32 %v2618, 3.8918573e-05
      %v2631 = vadd.f32 %v2630, 0.001143296
      %v2632 = vmul.f32 %v2618, %v2631
      %v2633 = vadd.f32 %v2632, 0.014752088
      %v2634 = vmul.f32 %v2618, %v2633
      %v2635 = vadd.f32 %v2634, 0.112945676
      %v2636 = vmul.f32 %v2618, %v2635
      %v2637 = vadd.f32 %v2636, 0.4994258
      %v2638 = vmul.f32 %v2618, %v2637
      %v2639 = vadd.f32 %v2638, 1.0
      %v2640 = vrcp.pop %v2639
      %v2641 = vmul.f32 %v2639, %v2640
      %v2642 = vsub.f32 1.0, %v2641
      %v2643 = vmul.f32 %v2640, %v2642
      %v2644 = vadd.f32 %v2640, %v2643
      %vm2645 = vweird.f32 %v2639
      %vm2646 = vweird.f32 %v2640
      %vm2647 = vmor %vm2645, %vm2646
      %v2648 = vsel %vm2647, %v2640, %v2644
      %v2649 = vand.u32 2147483647, %v2639
      %vm2650 = vcmp.eq.f32.partialorder %v2649, 8.507059e+37
      %v2651 = vand.u32 %v2639, 2147483648
      %v2652 = vor.u32 1.1754944e-38, %v2651
      %v2653 = vsel %vm2650, %v2652, %v2648
      %v2654 = vmul.f32 %v2629, %v2653
      %v2655 = vmin.f32 %v2654, 1.0
      %v2656 = vmax.f32 %v2655, -1.0
      %v2657 = vmul.f32 %v2329, %v2329
      %v2658 = vmin.f32 16.0, %v2657
      %v2659 = vmul.f32 %v2658, 2.1237322e-06
      %v2660 = vadd.f32 %v2659, 0.00028619796
      %v2661 = vmul.f32 %v2658, %v2660
      %v2662 = vadd.f32 %v2661, 0.0036580483
      %v2663 = vmul.f32 %v2658, %v2662
      %v2664 = vadd.f32 %v2663, 0.05243302
      %v2665 = vmul.f32 %v2658, %v2664
      %v2666 = vadd.f32 %v2665, 0.18741608
      %v2667 = vmul.f32 %v2658, %v2666
      %v2668 = vadd.f32 %v2667, 1.1283791
      %v2669 = vmul.f32 %v2329, %v2668
      %v2670 = vmul.f32 %v2658, 3.8918573e-05
      %v2671 = vadd.f32 %v2670, 0.001143296
      %v2672 = vmul.f32 %v2658, %v2671
      %v2673 = vadd.f32 %v2672, 0.014752088
      %v2674 = vmul.f32 %v2658, %v2673
      %v2675 = vadd.f32 %v2674, 0.112945676
      %v2676 = vmul.f32 %v2658, %v2675
      %v2677 = vadd.f32 %v2676, 0.4994258
      %v2678 = vmul.f32 %v2658, %v2677
      %v2679 = vadd.f32 %v2678, 1.0
      %v2680 = vrcp.pop %v2679
      %v2681 = vmul.f32 %v2679, %v2680
      %v2682 = vsub.f32 1.0, %v2681
      %v2683 = vmul.f32 %v2680, %v2682
      %v2684 = vadd.f32 %v2680, %v2683
      %vm2685 = vweird.f32 %v2679
      %vm2686 = vweird.f32 %v2680
      %vm2687 = vmor %vm2685, %vm2686
      %v2688 = vsel %vm2687, %v2680, %v2684
      %v2689 = vand.u32 2147483647, %v2679
      %vm2690 = vcmp.eq.f32.partialorder %v2689, 8.507059e+37
      %v2691 = vand.u32 %v2679, 2147483648
      %v2692 = vor.u32 1.1754944e-38, %v2691
      %v2693 = vsel %vm2690, %v2692, %v2688
      %v2694 = vmul.f32 %v2669, %v2693
      %v2695 = vmin.f32 %v2694, 1.0
      %v2696 = vmax.f32 %v2695, -1.0
      %v2697 = vmul.f32 %v2330, %v2330
      %v2698 = vmin.f32 16.0, %v2697
      %v2699 = vmul.f32 %v2698, 2.1237322e-06
      %v2700 = vadd.f32 %v2699, 0.00028619796
      %v2701 = vmul.f32 %v2698, %v2700
      %v2702 = vadd.f32 %v2701, 0.0036580483
      %v2703 = vmul.f32 %v2698, %v2702
      %v2704 = vadd.f32 %v2703, 0.05243302
      %v2705 = vmul.f32 %v2698, %v2704
      %v2706 = vadd.f32 %v2705, 0.18741608
      %v2707 = vmul.f32 %v2698, %v2706
      %v2708 = vadd.f32 %v2707, 1.1283791
      %v2709 = vmul.f32 %v2330, %v2708
      %v2710 = vmul.f32 %v2698, 3.8918573e-05
      %v2711 = vadd.f32 %v2710, 0.001143296
      %v2712 = vmul.f32 %v2698, %v2711
      %v2713 = vadd.f32 %v2712, 0.014752088
      %v2714 = vmul.f32 %v2698, %v2713
      %v2715 = vadd.f32 %v2714, 0.112945676
      %v2716 = vmul.f32 %v2698, %v2715
      %v2717 = vadd.f32 %v2716, 0.4994258
      %v2718 = vmul.f32 %v2698, %v2717
      %v2719 = vadd.f32 %v2718, 1.0
      %v2720 = vrcp.pop %v2719
      %v2721 = vmul.f32 %v2719, %v2720
      %v2722 = vsub.f32 1.0, %v2721
      %v2723 = vmul.f32 %v2720, %v2722
      %v2724 = vadd.f32 %v2720, %v2723
      %vm2725 = vweird.f32 %v2719
      %vm2726 = vweird.f32 %v2720
      %vm2727 = vmor %vm2725, %vm2726
      %v2728 = vsel %vm2727, %v2720, %v2724
      %v2729 = vand.u32 2147483647, %v2719
      %vm2730 = vcmp.eq.f32.partialorder %v2729, 8.507059e+37
      %v2731 = vand.u32 %v2719, 2147483648
      %v2732 = vor.u32 1.1754944e-38, %v2731
      %v2733 = vsel %vm2730, %v2732, %v2728
      %v2734 = vmul.f32 %v2709, %v2733
      %v2735 = vmin.f32 %v2734, 1.0
      %v2736 = vmax.f32 %v2735, -1.0
      %v2737 = vmul.f32 %v2331, %v2331
      %v2738 = vmin.f32 16.0, %v2737
      %v2739 = vmul.f32 %v2738, 2.1237322e-06
      %v2740 = vadd.f32 %v2739, 0.00028619796
      %v2741 = vmul.f32 %v2738, %v2740
      %v2742 = vadd.f32 %v2741, 0.0036580483
      %v2743 = vmul.f32 %v2738, %v2742
      %v2744 = vadd.f32 %v2743, 0.05243302
      %v2745 = vmul.f32 %v2738, %v2744
      %v2746 = vadd.f32 %v2745, 0.18741608
      %v2747 = vmul.f32 %v2738, %v2746
      %v2748 = vadd.f32 %v2747, 1.1283791
      %v2749 = vmul.f32 %v2331, %v2748
      %v2750 = vmul.f32 %v2738, 3.8918573e-05
      %v2751 = vadd.f32 %v2750, 0.001143296
      %v2752 = vmul.f32 %v2738, %v2751
      %v2753 = vadd.f32 %v2752, 0.014752088
      %v2754 = vmul.f32 %v2738, %v2753
      %v2755 = vadd.f32 %v2754, 0.112945676
      %v2756 = vmul.f32 %v2738, %v2755
      %v2757 = vadd.f32 %v2756, 0.4994258
      %v2758 = vmul.f32 %v2738, %v2757
      %v2759 = vadd.f32 %v2758, 1.0
      %v2760 = vrcp.pop %v2759
      %v2761 = vmul.f32 %v2759, %v2760
      %v2762 = vsub.f32 1.0, %v2761
      %v2763 = vmul.f32 %v2760, %v2762
      %v2764 = vadd.f32 %v2760, %v2763
      %vm2765 = vweird.f32 %v2759
      %vm2766 = vweird.f32 %v2760
      %vm2767 = vmor %vm2765, %vm2766
      %v2768 = vsel %vm2767, %v2760, %v2764
      %v2769 = vand.u32 2147483647, %v2759
      %vm2770 = vcmp.eq.f32.partialorder %v2769, 8.507059e+37
      %v2771 = vand.u32 %v2759, 2147483648
      %v2772 = vor.u32 1.1754944e-38, %v2771
      %v2773 = vsel %vm2770, %v2772, %v2768
      %v2774 = vmul.f32 %v2749, %v2773
      %v2775 = vmin.f32 %v2774, 1.0
      %v2776 = vmax.f32 %v2775, -1.0
      %v2777 = vmul.f32 %v2332, %v2332
      %v2778 = vmin.f32 16.0, %v2777
      %v2779 = vmul.f32 %v2778, 2.1237322e-06
      %v2780 = vadd.f32 %v2779, 0.00028619796
      %v2781 = vmul.f32 %v2778, %v2780
      %v2782 = vadd.f32 %v2781, 0.0036580483
      %v2783 = vmul.f32 %v2778, %v2782
      %v2784 = vadd.f32 %v2783, 0.05243302
      %v2785 = vmul.f32 %v2778, %v2784
      %v2786 = vadd.f32 %v2785, 0.18741608
      %v2787 = vmul.f32 %v2778, %v2786
      %v2788 = vadd.f32 %v2787, 1.1283791
      %v2789 = vmul.f32 %v2332, %v2788
      %v2790 = vmul.f32 %v2778, 3.8918573e-05
      %v2791 = vadd.f32 %v2790, 0.001143296
      %v2792 = vmul.f32 %v2778, %v2791
      %v2793 = vadd.f32 %v2792, 0.014752088
      %v2794 = vmul.f32 %v2778, %v2793
      %v2795 = vadd.f32 %v2794, 0.112945676
      %v2796 = vmul.f32 %v2778, %v2795
      %v2797 = vadd.f32 %v2796, 0.4994258
      %v2798 = vmul.f32 %v2778, %v2797
      %v2799 = vadd.f32 %v2798, 1.0
      %v2800 = vrcp.pop %v2799
      %v2801 = vmul.f32 %v2799, %v2800
      %v2802 = vsub.f32 1.0, %v2801
      %v2803 = vmul.f32 %v2800, %v2802
      %v2804 = vadd.f32 %v2800, %v2803
      %vm2805 = vweird.f32 %v2799
      %vm2806 = vweird.f32 %v2800
      %vm2807 = vmor %vm2805, %vm2806
      %v2808 = vsel %vm2807, %v2800, %v2804
      %v2809 = vand.u32 2147483647, %v2799
      %vm2810 = vcmp.eq.f32.partialorder %v2809, 8.507059e+37
      %v2811 = vand.u32 %v2799, 2147483648
      %v2812 = vor.u32 1.1754944e-38, %v2811
      %v2813 = vsel %vm2810, %v2812, %v2808
      %v2814 = vmul.f32 %v2789, %v2813
      %v2815 = vmin.f32 %v2814, 1.0
      %v2816 = vmax.f32 %v2815, -1.0
      %v2817 = vmul.f32 %v2333, %v2333
      %v2818 = vmin.f32 16.0, %v2817
      %v2819 = vmul.f32 %v2818, 2.1237322e-06
      %v2820 = vadd.f32 %v2819, 0.00028619796
      %v2821 = vmul.f32 %v2818, %v2820
      %v2822 = vadd.f32 %v2821, 0.0036580483
      %v2823 = vmul.f32 %v2818, %v2822
      %v2824 = vadd.f32 %v2823, 0.05243302
      %v2825 = vmul.f32 %v2818, %v2824
      %v2826 = vadd.f32 %v2825, 0.18741608
      %v2827 = vmul.f32 %v2818, %v2826
      %v2828 = vadd.f32 %v2827, 1.1283791
      %v2829 = vmul.f32 %v2333, %v2828
      %v2830 = vmul.f32 %v2818, 3.8918573e-05
      %v2831 = vadd.f32 %v2830, 0.001143296
      %v2832 = vmul.f32 %v2818, %v2831
      %v2833 = vadd.f32 %v2832, 0.014752088
      %v2834 = vmul.f32 %v2818, %v2833
      %v2835 = vadd.f32 %v2834, 0.112945676
      %v2836 = vmul.f32 %v2818, %v2835
      %v2837 = vadd.f32 %v2836, 0.4994258
      %v2838 = vmul.f32 %v2818, %v2837
      %v2839 = vadd.f32 %v2838, 1.0
      %v2840 = vrcp.pop %v2839
      %v2841 = vmul.f32 %v2839, %v2840
      %v2842 = vsub.f32 1.0, %v2841
      %v2843 = vmul.f32 %v2840, %v2842
      %v2844 = vadd.f32 %v2840, %v2843
      %vm2845 = vweird.f32 %v2839
      %vm2846 = vweird.f32 %v2840
      %vm2847 = vmor %vm2845, %vm2846
      %v2848 = vsel %vm2847, %v2840, %v2844
      %v2849 = vand.u32 2147483647, %v2839
      %vm2850 = vcmp.eq.f32.partialorder %v2849, 8.507059e+37
      %v2851 = vand.u32 %v2839, 2147483648
      %v2852 = vor.u32 1.1754944e-38, %v2851
      %v2853 = vsel %vm2850, %v2852, %v2848
      %v2854 = vmul.f32 %v2829, %v2853
      %v2855 = vmin.f32 %v2854, 1.0
      %v2856 = vmax.f32 %v2855, -1.0
      %v2857 = vmul.f32 %v2334, %v2334
      %v2858 = vmin.f32 16.0, %v2857
      %v2859 = vmul.f32 %v2858, 2.1237322e-06
      %v2860 = vadd.f32 %v2859, 0.00028619796
      %v2861 = vmul.f32 %v2858, %v2860
      %v2862 = vadd.f32 %v2861, 0.0036580483
      %v2863 = vmul.f32 %v2858, %v2862
      %v2864 = vadd.f32 %v2863, 0.05243302
      %v2865 = vmul.f32 %v2858, %v2864
      %v2866 = vadd.f32 %v2865, 0.18741608
      %v2867 = vmul.f32 %v2858, %v2866
      %v2868 = vadd.f32 %v2867, 1.1283791
      %v2869 = vmul.f32 %v2334, %v2868
      %v2870 = vmul.f32 %v2858, 3.8918573e-05
      %v2871 = vadd.f32 %v2870, 0.001143296
      %v2872 = vmul.f32 %v2858, %v2871
      %v2873 = vadd.f32 %v2872, 0.014752088
      %v2874 = vmul.f32 %v2858, %v2873
      %v2875 = vadd.f32 %v2874, 0.112945676
      %v2876 = vmul.f32 %v2858, %v2875
      %v2877 = vadd.f32 %v2876, 0.4994258
      %v2878 = vmul.f32 %v2858, %v2877
      %v2879 = vadd.f32 %v2878, 1.0
      %v2880 = vrcp.pop %v2879
      %v2881 = vmul.f32 %v2879, %v2880
      %v2882 = vsub.f32 1.0, %v2881
      %v2883 = vmul.f32 %v2880, %v2882
      %v2884 = vadd.f32 %v2880, %v2883
      %vm2885 = vweird.f32 %v2879
      %vm2886 = vweird.f32 %v2880
      %vm2887 = vmor %vm2885, %vm2886
      %v2888 = vsel %vm2887, %v2880, %v2884
      %v2889 = vand.u32 2147483647, %v2879
      %vm2890 = vcmp.eq.f32.partialorder %v2889, 8.507059e+37
      %v2891 = vand.u32 %v2879, 2147483648
      %v2892 = vor.u32 1.1754944e-38, %v2891
      %v2893 = vsel %vm2890, %v2892, %v2888
      %v2894 = vmul.f32 %v2869, %v2893
      %v2895 = vmin.f32 %v2894, 1.0
      %v2896 = vmax.f32 %v2895, -1.0
      %v2897 = vmul.f32 %v2335, %v2335
      %v2898 = vmin.f32 16.0, %v2897
      %v2899 = vmul.f32 %v2898, 2.1237322e-06
      %v2900 = vadd.f32 %v2899, 0.00028619796
      %v2901 = vmul.f32 %v2898, %v2900
      %v2902 = vadd.f32 %v2901, 0.0036580483
      %v2903 = vmul.f32 %v2898, %v2902
      %v2904 = vadd.f32 %v2903, 0.05243302
      %v2905 = vmul.f32 %v2898, %v2904
      %v2906 = vadd.f32 %v2905, 0.18741608
      %v2907 = vmul.f32 %v2898, %v2906
      %v2908 = vadd.f32 %v2907, 1.1283791
      %v2909 = vmul.f32 %v2335, %v2908
      %v2910 = vmul.f32 %v2898, 3.8918573e-05
      %v2911 = vadd.f32 %v2910, 0.001143296
      %v2912 = vmul.f32 %v2898, %v2911
      %v2913 = vadd.f32 %v2912, 0.014752088
      %v2914 = vmul.f32 %v2898, %v2913
      %v2915 = vadd.f32 %v2914, 0.112945676
      %v2916 = vmul.f32 %v2898, %v2915
      %v2917 = vadd.f32 %v2916, 0.4994258
      %v2918 = vmul.f32 %v2898, %v2917
      %v2919 = vadd.f32 %v2918, 1.0
      %v2920 = vrcp.pop %v2919
      %v2921 = vmul.f32 %v2919, %v2920
      %v2922 = vsub.f32 1.0, %v2921
      %v2923 = vmul.f32 %v2920, %v2922
      %v2924 = vadd.f32 %v2920, %v2923
      %vm2925 = vweird.f32 %v2919
      %vm2926 = vweird.f32 %v2920
      %vm2927 = vmor %vm2925, %vm2926
      %v2928 = vsel %vm2927, %v2920, %v2924
      %v2929 = vand.u32 2147483647, %v2919
      %vm2930 = vcmp.eq.f32.partialorder %v2929, 8.507059e+37
      %v2931 = vand.u32 %v2919, 2147483648
      %v2932 = vor.u32 1.1754944e-38, %v2931
      %v2933 = vsel %vm2930, %v2932, %v2928
      %v2934 = vmul.f32 %v2909, %v2933
      %v2935 = vmin.f32 %v2934, 1.0
      %v2936 = vmax.f32 %v2935, -1.0
      %v2937 = vmul.f32 %v2336, %v2336
      %v2938 = vmin.f32 16.0, %v2937
      %v2939 = vmul.f32 %v2938, 2.1237322e-06
      %v2940 = vadd.f32 %v2939, 0.00028619796
      %v2941 = vmul.f32 %v2938, %v2940
      %v2942 = vadd.f32 %v2941, 0.0036580483
      %v2943 = vmul.f32 %v2938, %v2942
      %v2944 = vadd.f32 %v2943, 0.05243302
      %v2945 = vmul.f32 %v2938, %v2944
      %v2946 = vadd.f32 %v2945, 0.18741608
      %v2947 = vmul.f32 %v2938, %v2946
      %v2948 = vadd.f32 %v2947, 1.1283791
      %v2949 = vmul.f32 %v2336, %v2948
      %v2950 = vmul.f32 %v2938, 3.8918573e-05
      %v2951 = vadd.f32 %v2950, 0.001143296
      %v2952 = vmul.f32 %v2938, %v2951
      %v2953 = vadd.f32 %v2952, 0.014752088
      %v2954 = vmul.f32 %v2938, %v2953
      %v2955 = vadd.f32 %v2954, 0.112945676
      %v2956 = vmul.f32 %v2938, %v2955
      %v2957 = vadd.f32 %v2956, 0.4994258
      %v2958 = vmul.f32 %v2938, %v2957
      %v2959 = vadd.f32 %v2958, 1.0
      %v2960 = vrcp.pop %v2959
      %v2961 = vmul.f32 %v2959, %v2960
      %v2962 = vsub.f32 1.0, %v2961
      %v2963 = vmul.f32 %v2960, %v2962
      %v2964 = vadd.f32 %v2960, %v2963
      %vm2965 = vweird.f32 %v2959
      %vm2966 = vweird.f32 %v2960
      %vm2967 = vmor %vm2965, %vm2966
      %v2968 = vsel %vm2967, %v2960, %v2964
      %v2969 = vand.u32 2147483647, %v2959
      %vm2970 = vcmp.eq.f32.partialorder %v2969, 8.507059e+37
      %v2971 = vand.u32 %v2959, 2147483648
      %v2972 = vor.u32 1.1754944e-38, %v2971
      %v2973 = vsel %vm2970, %v2972, %v2968
      %v2974 = vmul.f32 %v2949, %v2973
      %v2975 = vmin.f32 %v2974, 1.0
      %v2976 = vmax.f32 %v2975, -1.0
      %v2977 = vadd.f32 %v2376, 1.0
      %v2978 = vadd.f32 %v2416, 1.0
      %v2979 = vadd.f32 %v2456, 1.0
      %v2980 = vadd.f32 %v2496, 1.0
      %v2981 = vadd.f32 %v2536, 1.0
      %v2982 = vadd.f32 %v2576, 1.0
      %v2983 = vadd.f32 %v2616, 1.0
      %v2984 = vadd.f32 %v2656, 1.0
      %v2985 = vadd.f32 %v2696, 1.0
      %v2986 = vadd.f32 %v2736, 1.0
      %v2987 = vadd.f32 %v2776, 1.0
      %v2988 = vadd.f32 %v2816, 1.0
      %v2989 = vadd.f32 %v2856, 1.0
      %v2990 = vadd.f32 %v2896, 1.0
      %v2991 = vadd.f32 %v2936, 1.0
      %v2992 = vadd.f32 %v2976, 1.0
      %v2993 = vmul.f32 %v2305, %v2977
      %v2994 = vmul.f32 %v2306, %v2978
      %v2995 = vmul.f32 %v2307, %v2979
      %v2996 = vmul.f32 %v2308, %v2980
      %v2997 = vmul.f32 %v2309, %v2981
      %v2998 = vmul.f32 %v2310, %v2982
      %v2999 = vmul.f32 %v2311, %v2983
      %v3000 = vmul.f32 %v2312, %v2984
      %v3001 = vmul.f32 %v2313, %v2985
      %v3002 = vmul.f32 %v2314, %v2986
      %v3003 = vmul.f32 %v2315, %v2987
      %v3004 = vmul.f32 %v2316, %v2988
      %v3005 = vmul.f32 %v2317, %v2989
      %v3006 = vmul.f32 %v2318, %v2990
      %v3007 = vmul.f32 %v2319, %v2991
      %v3008 = vmul.f32 %v2320, %v2992
      %3009 = vst [vmem:[%s252] sm:$0xff] %v2993
      %3010 = vst [vmem:[%s252 + $0x8] sm:$0xff] %v2994
      %3011 = vst [vmem:[%s252 + $0x10] sm:$0xff] %v2995
      %3012 = vst [vmem:[%s252 + $0x18] sm:$0xff] %v2996
      %3013 = vst [vmem:[%s252 + $0x20] sm:$0xff] %v2997
      %3014 = vst [vmem:[%s252 + $0x28] sm:$0xff] %v2998
      %3015 = vst [vmem:[%s252 + $0x30] sm:$0xff] %v2999
      %3016 = vst [vmem:[%s252 + $0x38] sm:$0xff] %v3000
      %3017 = vst [vmem:[%s252 + $0x40] sm:$0xff] %v3001
      %3018 = vst [vmem:[%s252 + $0x48] sm:$0xff] %v3002
      %3019 = vst [vmem:[%s252 + $0x50] sm:$0xff] %v3003
      %3020 = vst [vmem:[%s252 + $0x58] sm:$0xff] %v3004
      %3021 = vst [vmem:[%s252 + $0x60] sm:$0xff] %v3005
      %3022 = vst [vmem:[%s252 + $0x68] sm:$0xff] %v3006
      %3023 = vst [vmem:[%s252 + $0x70] sm:$0xff] %v3007
      %3024 = vst [vmem:[%s252 + $0x78] sm:$0xff] %v3008
      %p3025 = scmp.lt.s32.totalorder %s18, 1
      %s3026 = scalar_select %p3025, %s18, 1
      %s3027 = smul.addr %s3026, 16
      %s3028 = smul.addr %s3027, 8
      %s3029 = scalar_lea.vmem %s7, %s3028
      // Predicated region
      $region49: #{head4x_forward.1} parent=43 // pred_check
        %p3030 = pneg %p167
      $region50: #{head4x_forward.1} parent=43 // pred_check_branch
        %3032 = sbr.rel (%p3030) target = $region52
      $region51: #{head4x_forward.1} parent=43 // pred_region
        _
      $region52: #{head4x_forward.1} parent=43 // pred_fallthru
        _
    $region44: #{head4x_forward.1} parent=5 // pred_fallthru
      _
    %p3033 = scmp.le.s32.totalorder 2, %s13
    // Predicated region
    $region53: #{head4x_forward.1} parent=5 // pred_check
      %p3034 = pneg %p3033
    $region54: #{head4x_forward.1} parent=5 // pred_check_branch
      %3036 = sbr.rel (%p3034) target = $region56
    $region55: #{head4x_forward.1} parent=5 // pred_region
      %s3037 = ssub.s32 %s13, 2
      // Predicated region
      $region57: #{head4x_forward.1} parent=55 // pred_check
        %p3038 = pneg %p173
      $region58: #{head4x_forward.1} parent=55 // pred_check_branch
        %3040 = sbr.rel (%p3038) target = $region60
      $region59: #{head4x_forward.1} parent=55 // pred_region
        %p3041 = scmp.lt.s32.totalorder %s19, 1
        %s3042 = scalar_select %p3041, %s19, 1
        %s3043 = smul.addr %s3042, 16
        %s3044 = smul.addr %s3043, 8
        %s3045 = scalar_lea.vmem %s7, %s3044
      $region60: #{head4x_forward.1} parent=55 // pred_fallthru
        _
    $region56: #{head4x_forward.1} parent=5 // pred_fallthru
      _
  $region6: #{head4x_forward.1} parent=0 // loop_footer
    %s17 = sadd.s32 1, %s13
  $region7: #{head4x_forward.1} parent=0 // loop_footer_branch
    %12 = sbr.rel target = $region3
  $region8: #{head4x_forward.1} parent=0 // loop_exit
    _
  %3046 = vsyncmov [#allocation3]
  %s3047 = vpop.sfrf %3046
  %p3048 = scmp.eq.s32.totalorder %s3047, 0
  %p3049 = pneg %p3048
  %3051 = shalt.err (%p3049)

</llo_original>
